<compile_context>
chip_gen: v6e
topology: v6e:2x2x1
jax: 0.10.0
libtpu: 0.0.40
codegen_flags: <defaults>
</compile_context>

<pallas_src>
import functools

import jax
import jax.numpy as jnp
import numpy as np
from jax.experimental import pallas as pl
from jax.experimental.pallas import tpu as pltpu


def _round_up(x, m):
    return ((x + m - 1) // m) * m


def _vmem_limit_bytes():
    # Derive the scoped-VMEM limit from hardware instead of hard-coding
    # (v7x only has 64 MiB per TensorCore).  Per-step footprint here is tiny,
    # so half of physical is a very safe cap; fall back to compiler default.
    try:
        cap = int(getattr(pltpu.get_tpu_info(), "vmem_capacity_bytes", 0))
        if cap >= (16 << 20):
            return cap // 2
    except Exception:
        pass
    return None


def _normconv_kernel(ya_ref, yb_ref, w_ref, b_ref, o_ref, *, shifts, tm):
    # ya_ref : (Cin, TM)          f32  planar activation tile (spatial on lanes)
    # yb_ref : (Cin, HALO)        f32  right halo of the same row span
    # w_ref  : (KH*KW, Cp8, Cin)  f32  gamma-folded weight-norm taps (tiny, resident)
    # b_ref  : (Cp8, 1)           f32  gamma*bias + beta
    # o_ref  : (Cp8, TM)          f32  transposed output tile (lane-dense)
    win = jnp.concatenate([ya_ref[...], yb_ref[...]], axis=-1)   # (Cin, TM+HALO)

    s0 = shifts[0]
    # accumulator initialized with tap 0 + folded bias (no zeros pass)
    acc = jnp.dot(w_ref[0], win[:, s0:s0 + tm],
                  preferred_element_type=jnp.float32) + b_ref[...]
    for t in range(1, len(shifts)):          # unrolled: KH*KW-1 small taps
        s = shifts[t]
        acc = acc + jnp.dot(w_ref[t], win[:, s:s + tm],
                            preferred_element_type=jnp.float32)
    o_ref[...] = acc


def norm_conv2d(x_nchw, v, g, bias, gamma, beta, *, stride=1, padding=0, tm=512):
    """x_nchw: (N, Cin, H, W).  v: (Cout, Cin, KH, KW), g: (Cout,1,1,1),
    bias: (Cout,), gamma/beta: (1, Cout, 1, 1).  Returns (N, Cout, OH, OW) f32."""
    N, Cin, H, W = x_nchw.shape
    Cout, _, KH, KW = v.shape

    Hp, Wp = H + 2 * padding, W + 2 * padding
    OHd, OWd = Hp - KH + 1, Wp - KW + 1          # dense (stride-1) output dims
    assert OHd > 0 and OWd > 0, "kernel larger than padded input"

    # ---- weight norm + gamma/bias folding (f32 parameter math) --------------
    # NOTE: no epsilon, matching torch weight_norm (all-zero V would NaN there too).
    v32 = v.astype(jnp.float32)
    v_norm = jnp.sqrt(jnp.sum(v32 * v32, axis=(1, 2, 3), keepdims=True))
    w = g.astype(jnp.float32) * v32 / v_norm                      # (Cout,Cin,KH,KW)
    w = w * gamma.astype(jnp.float32).reshape(Cout, 1, 1, 1)      # fold gamma into W
    b_eff = (gamma.astype(jnp.float32).reshape(Cout) * bias.astype(jnp.float32)
             + beta.astype(jnp.float32).reshape(Cout))            # (Cout,)

    Cp8 = _round_up(Cout, 8)                                      # sublane pad only
    # (Cout,Cin,KH,KW) -> (KH*KW, Cout, Cin), pad Cout -> Cp8 (f32)
    w_taps = jnp.transpose(w, (2, 3, 0, 1)).reshape(KH * KW, Cout, Cin)
    w_taps = jnp.pad(w_taps, ((0, 0), (0, Cp8 - Cout), (0, 0)))
    b_col = jnp.pad(b_eff, (0, Cp8 - Cout)).reshape(Cp8, 1)

    # ---- planar activation: pad spatially, flatten rows (NO transpose) ------
    Mflat = OHd * Wp                              # dense output cols (incl. wrap cols)
    max_shift = (KH - 1) * Wp + (KW - 1)          # largest flattened tap offset
    HALO = _round_up(max(max_shift, 1), 128)      # lane-aligned halo width
    TM = min(tm, _round_up(Mflat, 128))
    TM = _round_up(max(TM, HALO), HALO)           # TM % HALO == 0, TM >= max_shift
    n_m = pl.cdiv(Mflat, TM)
    Mpad = n_m * TM
    L = Mpad + TM                                 # both TM and HALO divide L

    xpad = jnp.pad(x_nchw.astype(jnp.float32),
                   ((0, 0), (0, 0), (padding, padding), (padding, padding)))
    y = xpad.reshape(N, Cin, Hp * Wp)             # contiguous reshape, no transpose
    y = jnp.pad(y, ((0, 0), (0, 0), (0, L - Hp * Wp)))

    # flattened static tap offsets: y[c, r + ki*Wp + kj] == xpad[c, oh+ki, ow+kj]
    shifts = tuple(ki * Wp + kj for ki in range(KH) for kj in range(KW))
    ratio = TM // HALO
    kernel = functools.partial(_normconv_kernel, shifts=shifts, tm=TM)

    out_t = pl.pallas_call(
        kernel,
        out_shape=jax.ShapeDtypeStruct((N, Cp8, Mpad), jnp.float32),
        grid_spec=pltpu.PrefetchScalarGridSpec(
            num_scalar_prefetch=0,
            grid=(N, n_m),
            in_specs=[
                # activation tile: (Cin, TM) window at column m*TM
                pl.BlockSpec((None, Cin, TM), lambda n, m: (n, 0, m)),
                # right halo of the same array: (Cin, HALO) at column (m+1)*TM
                pl.BlockSpec((None, Cin, HALO),
                             lambda n, m: (n, 0, (m + 1) * ratio)),
                # folded per-tap weights, resident (tiny)
                pl.BlockSpec((KH * KW, Cp8, Cin), lambda n, m: (0, 0, 0)),
                # folded bias column, resident
                pl.BlockSpec((Cp8, 1), lambda n, m: (0, 0)),
            ],
            out_specs=pl.BlockSpec((None, Cp8, TM), lambda n, m: (n, 0, m)),
        ),
        compiler_params=pltpu.CompilerParams(
            dimension_semantics=("parallel", "parallel"),
            vmem_limit_bytes=_vmem_limit_bytes(),
        ),
    )(y, y, w_taps, b_col)        # same activation array feeds both y BlockSpecs

    # drop channel/row padding and wrap columns; already NCHW (no transpose)
    out = out_t[:, :Cout, :Mflat].reshape(N, Cout, OHd, Wp)[:, :, :, :OWd]
    if stride > 1:
        out = out[:, :, ::stride, ::stride]
    return out


def _reference(x_nchw, v, g, bias, gamma, beta, stride, padding):
    v_norm = jnp.sqrt(jnp.sum(v ** 2, axis=(1, 2, 3), keepdims=True))
    weight = g * v / v_norm
    out = jax.lax.conv_general_dilated(
        x_nchw, weight,
        window_strides=(stride, stride),
        padding=((padding, padding), (padding, padding)),
        dimension_numbers=("NCHW", "OIHW", "NCHW"),
    )
    out = out + bias.reshape(1, -1, 1, 1)
    return gamma * out + beta


if __name__ == "__main__":
    key = jax.random.PRNGKey(0)
    k1, k2, k3, k4, k5, k6 = jax.random.split(key, 6)

    # shapes consistent with the module: NormConv2d(4, 8, 3, stride=1, padding=1)
    N, Cin, H, W = 2, 4, 16, 16
    Cout, KH, KW = 8, 3, 3
    stride, padding = 1, 1

    x = jax.random.normal(k1, (N, Cin, H, W), jnp.float32)
    v = jax.random.normal(k2, (Cout, Cin, KH, KW), jnp.float32) * 0.1   # weight_norm 'v'
    g = jax.random.uniform(k3, (Cout, 1, 1, 1), jnp.float32, 0.5, 1.5)  # weight_norm 'g'
    bias = jax.random.normal(k4, (Cout,), jnp.float32) * 0.1
    gamma = jax.random.uniform(k5, (1, Cout, 1, 1), jnp.float32, 0.5, 1.5)
    beta = jax.random.normal(k6, (1, Cout, 1, 1), jnp.float32) * 0.1

    fwd = jax.jit(functools.partial(norm_conv2d, stride=stride, padding=padding))
    out = jax.block_until_ready(fwd(x, v, g, bias, gamma, beta))

    ref = jax.block_until_ready(_reference(x, v, g, bias, gamma, beta, stride, padding))
    assert out.shape == (N, Cout, H, W)
    # all-f32 path: observed error is ~1e-6; tolerance kept loose only to stay
    # robust to backend default matmul/conv precision choices.
    np.testing.assert_allclose(np.asarray(out), np.asarray(ref), rtol=1e-2, atol=1e-2)

    print("KERNEL_OK")
</pallas_src>

<mosaic_0001>
module attributes {stable_mosaic.version = 11 : i64} {
  func.func @_normconv_kernel(%arg0: i32, %arg1: i32, %arg2: memref<1x4x384xf32, #tpu.memory_space<vmem>>, %arg3: memref<1x4x128xf32, #tpu.memory_space<vmem>>, %arg4: memref<9x8x4xf32, #tpu.memory_space<vmem>>, %arg5: memref<8x1xf32, #tpu.memory_space<vmem>>, %arg6: memref<1x8x384xf32, #tpu.memory_space<vmem>>) attributes {dimension_semantics = [#tpu.dimension_semantics<parallel>, #tpu.dimension_semantics<parallel>], iteration_bounds = array<i64: 2, 1>, scalar_prefetch = 0 : i64, scratch_operands = 0 : i64, tpu.core_type = #tpu.core_type<tc>, window_params = [{transform_indices = @transform_0, window_bounds = array<i64: 1, 4, 384>}, {transform_indices = @transform_1, window_bounds = array<i64: 1, 4, 128>}, {pipeline_mode = #tpu.pipeline_mode<synchronous>, transform_indices = @transform_2, window_bounds = array<i64: 9, 8, 4>}, {pipeline_mode = #tpu.pipeline_mode<synchronous>, transform_indices = @transform_3, window_bounds = array<i64: 8, 1>}, {transform_indices = @transform_4, window_bounds = array<i64: 1, 8, 384>}]} {
    %c0 = arith.constant 0 : index
    %c0_0 = arith.constant 0 : index
    %c0_1 = arith.constant 0 : index
    %0 = vector.load %arg2[%c0, %c0_0, %c0_1] : memref<1x4x384xf32, #tpu.memory_space<vmem>>, vector<1x4x384xf32>
    %1 = vector.shape_cast %0 : vector<1x4x384xf32> to vector<4x384xf32>
    %c0_2 = arith.constant 0 : index
    %c0_3 = arith.constant 0 : index
    %c0_4 = arith.constant 0 : index
    %2 = vector.load %arg3[%c0_2, %c0_3, %c0_4] : memref<1x4x128xf32, #tpu.memory_space<vmem>>, vector<1x4x128xf32>
    %3 = vector.shape_cast %2 : vector<1x4x128xf32> to vector<4x128xf32>
    %4 = tpu.concatenate %1, %3 in 1 : vector<4x384xf32>, vector<4x128xf32> -> vector<4x512xf32>
    %c0_5 = arith.constant 0 : index
    %c0_6 = arith.constant 0 : index
    %c0_7 = arith.constant 0 : index
    %5 = vector.load %arg4[%c0_5, %c0_6, %c0_7] : memref<9x8x4xf32, #tpu.memory_space<vmem>>, vector<1x8x4xf32>
    %6 = vector.shape_cast %5 : vector<1x8x4xf32> to vector<8x4xf32>
    %7 = vector.extract_strided_slice %4 {offsets = [0, 0], sizes = [4, 384], strides = [1, 1]} : vector<4x512xf32> to vector<4x384xf32>
    %cst = arith.constant dense<0.000000e+00> : vector<8x384xf32>
    %8 = tpu.matmul %6, %7, %cst {dimension_numbers = #tpu.dot_dimension_numbers<[1], [0], [0], [1], [0, 0, 1, 1], [], []>} : vector<8x4xf32>, vector<4x384xf32>, vector<8x384xf32> -> vector<8x384xf32>
    %c0_8 = arith.constant 0 : index
    %c0_9 = arith.constant 0 : index
    %9 = vector.load %arg5[%c0_8, %c0_9] : memref<8x1xf32, #tpu.memory_space<vmem>>, vector<8x1xf32>
    %10 = vector.broadcast %9 : vector<8x1xf32> to vector<8x384xf32>
    %11 = arith.addf %8, %10 : vector<8x384xf32>
    %c1 = arith.constant 1 : index
    %c0_10 = arith.constant 0 : index
    %c0_11 = arith.constant 0 : index
    %12 = vector.load %arg4[%c1, %c0_10, %c0_11] : memref<9x8x4xf32, #tpu.memory_space<vmem>>, vector<1x8x4xf32>
    %13 = vector.shape_cast %12 : vector<1x8x4xf32> to vector<8x4xf32>
    %14 = vector.extract_strided_slice %4 {offsets = [0, 1], sizes = [4, 384], strides = [1, 1]} : vector<4x512xf32> to vector<4x384xf32>
    %cst_12 = arith.constant dense<0.000000e+00> : vector<8x384xf32>
    %15 = tpu.matmul %13, %14, %cst_12 {dimension_numbers = #tpu.dot_dimension_numbers<[1], [0], [0], [1], [0, 0, 1, 1], [], []>} : vector<8x4xf32>, vector<4x384xf32>, vector<8x384xf32> -> vector<8x384xf32>
    %16 = arith.addf %11, %15 : vector<8x384xf32>
    %c2 = arith.constant 2 : index
    %c0_13 = arith.constant 0 : index
    %c0_14 = arith.constant 0 : index
    %17 = vector.load %arg4[%c2, %c0_13, %c0_14] : memref<9x8x4xf32, #tpu.memory_space<vmem>>, vector<1x8x4xf32>
    %18 = vector.shape_cast %17 : vector<1x8x4xf32> to vector<8x4xf32>
    %19 = vector.extract_strided_slice %4 {offsets = [0, 2], sizes = [4, 384], strides = [1, 1]} : vector<4x512xf32> to vector<4x384xf32>
    %cst_15 = arith.constant dense<0.000000e+00> : vector<8x384xf32>
    %20 = tpu.matmul %18, %19, %cst_15 {dimension_numbers = #tpu.dot_dimension_numbers<[1], [0], [0], [1], [0, 0, 1, 1], [], []>} : vector<8x4xf32>, vector<4x384xf32>, vector<8x384xf32> -> vector<8x384xf32>
    %21 = arith.addf %16, %20 : vector<8x384xf32>
    %c3 = arith.constant 3 : index
    %c0_16 = arith.constant 0 : index
    %c0_17 = arith.constant 0 : index
    %22 = vector.load %arg4[%c3, %c0_16, %c0_17] : memref<9x8x4xf32, #tpu.memory_space<vmem>>, vector<1x8x4xf32>
    %23 = vector.shape_cast %22 : vector<1x8x4xf32> to vector<8x4xf32>
    %24 = vector.extract_strided_slice %4 {offsets = [0, 18], sizes = [4, 384], strides = [1, 1]} : vector<4x512xf32> to vector<4x384xf32>
    %cst_18 = arith.constant dense<0.000000e+00> : vector<8x384xf32>
    %25 = tpu.matmul %23, %24, %cst_18 {dimension_numbers = #tpu.dot_dimension_numbers<[1], [0], [0], [1], [0, 0, 1, 1], [], []>} : vector<8x4xf32>, vector<4x384xf32>, vector<8x384xf32> -> vector<8x384xf32>
    %26 = arith.addf %21, %25 : vector<8x384xf32>
    %c4 = arith.constant 4 : index
    %c0_19 = arith.constant 0 : index
    %c0_20 = arith.constant 0 : index
    %27 = vector.load %arg4[%c4, %c0_19, %c0_20] : memref<9x8x4xf32, #tpu.memory_space<vmem>>, vector<1x8x4xf32>
    %28 = vector.shape_cast %27 : vector<1x8x4xf32> to vector<8x4xf32>
    %29 = vector.extract_strided_slice %4 {offsets = [0, 19], sizes = [4, 384], strides = [1, 1]} : vector<4x512xf32> to vector<4x384xf32>
    %cst_21 = arith.constant dense<0.000000e+00> : vector<8x384xf32>
    %30 = tpu.matmul %28, %29, %cst_21 {dimension_numbers = #tpu.dot_dimension_numbers<[1], [0], [0], [1], [0, 0, 1, 1], [], []>} : vector<8x4xf32>, vector<4x384xf32>, vector<8x384xf32> -> vector<8x384xf32>
    %31 = arith.addf %26, %30 : vector<8x384xf32>
    %c5 = arith.constant 5 : index
    %c0_22 = arith.constant 0 : index
    %c0_23 = arith.constant 0 : index
    %32 = vector.load %arg4[%c5, %c0_22, %c0_23] : memref<9x8x4xf32, #tpu.memory_space<vmem>>, vector<1x8x4xf32>
    %33 = vector.shape_cast %32 : vector<1x8x4xf32> to vector<8x4xf32>
    %34 = vector.extract_strided_slice %4 {offsets = [0, 20], sizes = [4, 384], strides = [1, 1]} : vector<4x512xf32> to vector<4x384xf32>
    %cst_24 = arith.constant dense<0.000000e+00> : vector<8x384xf32>
    %35 = tpu.matmul %33, %34, %cst_24 {dimension_numbers = #tpu.dot_dimension_numbers<[1], [0], [0], [1], [0, 0, 1, 1], [], []>} : vector<8x4xf32>, vector<4x384xf32>, vector<8x384xf32> -> vector<8x384xf32>
    %36 = arith.addf %31, %35 : vector<8x384xf32>
    %c6 = arith.constant 6 : index
    %c0_25 = arith.constant 0 : index
    %c0_26 = arith.constant 0 : index
    %37 = vector.load %arg4[%c6, %c0_25, %c0_26] : memref<9x8x4xf32, #tpu.memory_space<vmem>>, vector<1x8x4xf32>
    %38 = vector.shape_cast %37 : vector<1x8x4xf32> to vector<8x4xf32>
    %39 = vector.extract_strided_slice %4 {offsets = [0, 36], sizes = [4, 384], strides = [1, 1]} : vector<4x512xf32> to vector<4x384xf32>
    %cst_27 = arith.constant dense<0.000000e+00> : vector<8x384xf32>
    %40 = tpu.matmul %38, %39, %cst_27 {dimension_numbers = #tpu.dot_dimension_numbers<[1], [0], [0], [1], [0, 0, 1, 1], [], []>} : vector<8x4xf32>, vector<4x384xf32>, vector<8x384xf32> -> vector<8x384xf32>
    %41 = arith.addf %36, %40 : vector<8x384xf32>
    %c7 = arith.constant 7 : index
    %c0_28 = arith.constant 0 : index
    %c0_29 = arith.constant 0 : index
    %42 = vector.load %arg4[%c7, %c0_28, %c0_29] : memref<9x8x4xf32, #tpu.memory_space<vmem>>, vector<1x8x4xf32>
    %43 = vector.shape_cast %42 : vector<1x8x4xf32> to vector<8x4xf32>
    %44 = vector.extract_strided_slice %4 {offsets = [0, 37], sizes = [4, 384], strides = [1, 1]} : vector<4x512xf32> to vector<4x384xf32>
    %cst_30 = arith.constant dense<0.000000e+00> : vector<8x384xf32>
    %45 = tpu.matmul %43, %44, %cst_30 {dimension_numbers = #tpu.dot_dimension_numbers<[1], [0], [0], [1], [0, 0, 1, 1], [], []>} : vector<8x4xf32>, vector<4x384xf32>, vector<8x384xf32> -> vector<8x384xf32>
    %46 = arith.addf %41, %45 : vector<8x384xf32>
    %c8 = arith.constant 8 : index
    %c0_31 = arith.constant 0 : index
    %c0_32 = arith.constant 0 : index
    %47 = vector.load %arg4[%c8, %c0_31, %c0_32] : memref<9x8x4xf32, #tpu.memory_space<vmem>>, vector<1x8x4xf32>
    %48 = vector.shape_cast %47 : vector<1x8x4xf32> to vector<8x4xf32>
    %49 = vector.extract_strided_slice %4 {offsets = [0, 38], sizes = [4, 384], strides = [1, 1]} : vector<4x512xf32> to vector<4x384xf32>
    %cst_33 = arith.constant dense<0.000000e+00> : vector<8x384xf32>
    %50 = tpu.matmul %48, %49, %cst_33 {dimension_numbers = #tpu.dot_dimension_numbers<[1], [0], [0], [1], [0, 0, 1, 1], [], []>} : vector<8x4xf32>, vector<4x384xf32>, vector<8x384xf32> -> vector<8x384xf32>
    %51 = arith.addf %46, %50 : vector<8x384xf32>
    %c0_34 = arith.constant 0 : index
    %c0_35 = arith.constant 0 : index
    %c0_36 = arith.constant 0 : index
    %52 = vector.load %arg6[%c0_34, %c0_35, %c0_36] : memref<1x8x384xf32, #tpu.memory_space<vmem>>, vector<1x8x384xf32>
    %53 = vector.shape_cast %52 : vector<1x8x384xf32> to vector<8x384xf32>
    %54 = vector.shape_cast %51 : vector<8x384xf32> to vector<1x8x384xf32>
    tpu.vector_store %arg6[%c0_34, %c0_35, %c0_36], %54 {strides = array<i32>} : memref<1x8x384xf32, #tpu.memory_space<vmem>>, vector<1x8x384xf32>,
    return
  }
  func.func @transform_0(%arg0: i32, %arg1: i32) -> (i32, i32, i32) {
    %c0_i32 = arith.constant 0 : i32
    %c0_i32_0 = arith.constant 0 : i32
    return %arg0, %c0_i32, %arg1 : i32, i32, i32
  }
  func.func @transform_1(%arg0: i32, %arg1: i32) -> (i32, i32, i32) {
    %c1_i32 = arith.constant 1 : i32
    %0 = arith.addi %arg1, %c1_i32 : i32
    %c3_i32 = arith.constant 3 : i32
    %1 = arith.muli %0, %c3_i32 : i32
    %c0_i32 = arith.constant 0 : i32
    %c0_i32_0 = arith.constant 0 : i32
    return %arg0, %c0_i32, %1 : i32, i32, i32
  }
  func.func @transform_2(%arg0: i32, %arg1: i32) -> (i32, i32, i32) {
    %c0_i32 = arith.constant 0 : i32
    %c0_i32_0 = arith.constant 0 : i32
    %c0_i32_1 = arith.constant 0 : i32
    %c0_i32_2 = arith.constant 0 : i32
    return %c0_i32, %c0_i32_0, %c0_i32_1 : i32, i32, i32
  }
  func.func @transform_3(%arg0: i32, %arg1: i32) -> (i32, i32) {
    %c0_i32 = arith.constant 0 : i32
    %c0_i32_0 = arith.constant 0 : i32
    %c0_i32_1 = arith.constant 0 : i32
    return %c0_i32, %c0_i32_0 : i32, i32
  }
  func.func @transform_4(%arg0: i32, %arg1: i32) -> (i32, i32, i32) {
    %c0_i32 = arith.constant 0 : i32
    %c0_i32_0 = arith.constant 0 : i32
    return %arg0, %c0_i32, %arg1 : i32, i32, i32
  }
}

</mosaic_0001>

<llo_original>
// kernel: norm_conv2d.1
$region0: #{norm_conv2d.1}
  #allocation0 [shape = 'u32[]', space=smem, size = 0x4, offset = 0x4, fixed_abs, tag = 'smem constant byte address 0x4 - core index']
  #allocation1 [shape = 'u32[144,128]{1,0:T(1,128)}', space=vmem, size = 0x12000, scoped, tag = 'internal scratch']
  %s0 = inlined_call_operand.vmem [shape: f32[2,4,768], index: 0, kind: input, shape index: {}, may-alias: {0,1}]
  %s1 = inlined_call_operand.vmem [shape: f32[2,4,768], index: 1, kind: input, shape index: {}, may-alias: {0,1}]
  %s2 = inlined_call_operand.vmem [shape: f32[9,8,4], index: 2, kind: input, shape index: {}]
  %s3 = inlined_call_operand.vmem [shape: f32[8,1], index: 3, kind: input, shape index: {}]
  %s4 = inlined_call_operand.vmem [shape: f32[2,8,384], index: 4, kind: output, shape index: {}]
  %s5 = sld [smem:[#allocation0]]
  $region49: #{norm_conv2d.1} parent=0
    _
  %s7 = ssub.s32 1, %s5
  %s8 = scalar_select 0, %s7, %s5
  loop: start=0, step=1, limit=4
  $region2: #{norm_conv2d.1} parent=0 // loop_pre_header
    _
  $region3: #{norm_conv2d.1} parent=0 // loop_header
    %s10 = sphi 0, %s14
    %p11 = scmp.ge.s32.totalorder %s10, 4
    %s17 = sphi 0, %s29
    %s18 = sphi 0, %s25
    %s19 = sphi 0, %s17
    %s20 = sphi 0, %s18
    %s21 = sphi 0, %s19
    %s22 = sphi 0, %s20
    %s34 = sphi 0, %s36
    %s37 = sphi 0, %s34
    %s38 = sphi 0, %s37
    %s54 = sphi 0, %s38
    %s66 = sphi 0, %s68
    %s69 = sphi 0, %s66
    %s70 = sphi 0, %s69
    %s86 = sphi 0, %s70
    %s90 = sphi 0, %s90
    %s92 = sphi 0, %s90
    %s93 = sphi 0, %s92
    %s107 = sphi 0, %s93
    %s111 = sphi 0, %s111
    %s113 = sphi 0, %s111
    %s114 = sphi 0, %s113
    %s128 = sphi 0, %s114
    %s136 = sphi 0, %s138
    %s139 = sphi 0, %s136
    %s140 = sphi 0, %s139
    %s156 = sphi 0, %s140
  $region4: #{norm_conv2d.1} parent=0 // loop_header_branch
    %13 = sbr.rel (%p11) target = $region8
  $region5: #{norm_conv2d.1} parent=0 // loop_body
    %s15 = ssub.s32 %s10, 1
    %s16 = ssub.s32 %s10, 2
    %s23 = sadd.s32 1, %s18
    %p24 = scmp.ge.s32.totalorder %s23, 1
    %s25 = scalar_select %p24, 0, %s23
    %s26 = sadd.s32 1, %s17
    %s27 = scalar_select %p24, %s26, %s17
    %p28 = scmp.ge.s32.totalorder %s27, 2
    %s29 = scalar_select %p28, 0, %s27
    %s30 = ssub.s32 %s17, %s29
    %s31 = ssub.s32 %s18, %s25
    %s32 = sor.u32 %s30, %s31
    %p33 = scmp.eq.s32.totalorder %s32, 0
    %s35 = sadd.s32 %s34, 1
    %s36 = scalar_select %p33, %s34, %s35
    %p39 = pneg %p33
    %p40 = scmp.eq.s32.totalorder %s10, 1
    %p41 = por %p39, %p40
    %p42 = scmp.ne.s32.totalorder %s34, %s37
    %p43 = scmp.eq.s32.totalorder %s10, 0
    %p44 = por %p42, %p43
    %p45 = scmp.ne.s32.totalorder %s34, %s37
    %p46 = scmp.eq.s32.totalorder %s15, 1
    %p47 = por %p45, %p46
    %p48 = scmp.ne.s32.totalorder %s37, %s38
    %p49 = scmp.eq.s32.totalorder %s15, 0
    %p50 = por %p48, %p49
    %p51 = scmp.ne.s32.totalorder %s37, %s38
    %p52 = scmp.eq.s32.totalorder %s16, 1
    %p53 = por %p51, %p52
    %p55 = scmp.ne.s32.totalorder %s38, %s54
    %p56 = scmp.eq.s32.totalorder %s16, 0
    %p57 = por %p55, %p56
    %s58 = sadd.s32 %s18, 1
    %s59 = smul.u32 %s58, 3
    %s60 = sadd.s32 %s25, 1
    %s61 = smul.u32 %s60, 3
    %s62 = ssub.s32 %s17, %s29
    %s63 = ssub.s32 %s59, %s61
    %s64 = sor.u32 %s62, %s63
    %p65 = scmp.eq.s32.totalorder %s64, 0
    %s67 = sadd.s32 %s66, 1
    %s68 = scalar_select %p65, %s66, %s67
    %p71 = pneg %p65
    %p72 = scmp.eq.s32.totalorder %s10, 1
    %p73 = por %p71, %p72
    %p74 = scmp.ne.s32.totalorder %s66, %s69
    %p75 = scmp.eq.s32.totalorder %s10, 0
    %p76 = por %p74, %p75
    %p77 = scmp.ne.s32.totalorder %s66, %s69
    %p78 = scmp.eq.s32.totalorder %s15, 1
    %p79 = por %p77, %p78
    %p80 = scmp.ne.s32.totalorder %s69, %s70
    %p81 = scmp.eq.s32.totalorder %s15, 0
    %p82 = por %p80, %p81
    %p83 = scmp.ne.s32.totalorder %s69, %s70
    %p84 = scmp.eq.s32.totalorder %s16, 1
    %p85 = por %p83, %p84
    %p87 = scmp.ne.s32.totalorder %s70, %s86
    %p88 = scmp.eq.s32.totalorder %s16, 0
    %p89 = por %p87, %p88
    %s91 = sadd.s32 %s90, 1
    %p94 = scmp.eq.s32.totalorder %s10, 1
    %p95 = scmp.ne.s32.totalorder %s90, %s92
    %p96 = scmp.eq.s32.totalorder %s10, 0
    %p97 = por %p95, %p96
    %p98 = scmp.ne.s32.totalorder %s90, %s92
    %p99 = scmp.eq.s32.totalorder %s15, 1
    %p100 = por %p98, %p99
    %p101 = scmp.ne.s32.totalorder %s92, %s93
    %p102 = scmp.eq.s32.totalorder %s15, 0
    %p103 = por %p101, %p102
    %p104 = scmp.ne.s32.totalorder %s92, %s93
    %p105 = scmp.eq.s32.totalorder %s16, 1
    %p106 = por %p104, %p105
    %p108 = scmp.ne.s32.totalorder %s93, %s107
    %p109 = scmp.eq.s32.totalorder %s16, 0
    %p110 = por %p108, %p109
    %s112 = sadd.s32 %s111, 1
    %p115 = scmp.eq.s32.totalorder %s10, 1
    %p116 = scmp.ne.s32.totalorder %s111, %s113
    %p117 = scmp.eq.s32.totalorder %s10, 0
    %p118 = por %p116, %p117
    %p119 = scmp.ne.s32.totalorder %s111, %s113
    %p120 = scmp.eq.s32.totalorder %s15, 1
    %p121 = por %p119, %p120
    %p122 = scmp.ne.s32.totalorder %s113, %s114
    %p123 = scmp.eq.s32.totalorder %s15, 0
    %p124 = por %p122, %p123
    %p125 = scmp.ne.s32.totalorder %s113, %s114
    %p126 = scmp.eq.s32.totalorder %s16, 1
    %p127 = por %p125, %p126
    %p129 = scmp.ne.s32.totalorder %s114, %s128
    %p130 = scmp.eq.s32.totalorder %s16, 0
    %p131 = por %p129, %p130
    %s132 = ssub.s32 %s17, %s29
    %s133 = ssub.s32 %s18, %s25
    %s134 = sor.u32 %s132, %s133
    %p135 = scmp.eq.s32.totalorder %s134, 0
    %s137 = sadd.s32 %s136, 1
    %s138 = scalar_select %p135, %s136, %s137
    %p141 = pneg %p135
    %p142 = scmp.eq.s32.totalorder %s10, 1
    %p143 = por %p141, %p142
    %p144 = scmp.ne.s32.totalorder %s136, %s139
    %p145 = scmp.eq.s32.totalorder %s10, 0
    %p146 = por %p144, %p145
    %p147 = scmp.ne.s32.totalorder %s136, %s139
    %p148 = scmp.eq.s32.totalorder %s15, 1
    %p149 = por %p147, %p148
    %p150 = scmp.ne.s32.totalorder %s139, %s140
    %p151 = scmp.eq.s32.totalorder %s15, 0
    %p152 = por %p150, %p151
    %p153 = scmp.ne.s32.totalorder %s139, %s140
    %p154 = scmp.eq.s32.totalorder %s16, 1
    %p155 = por %p153, %p154
    %p157 = scmp.ne.s32.totalorder %s140, %s156
    %p158 = scmp.eq.s32.totalorder %s16, 0
    %p159 = por %p157, %p158
    %p160 = scmp.le.s32.totalorder 1, %s10
    %p161 = scmp.lt.s32.totalorder %s10, 3
    %p162 = pnand %p160, %p161
    %p163 = pneg %p162
    // Predicated region
    $region9: #{norm_conv2d.1} parent=5 // pred_check
      _
    $region10: #{norm_conv2d.1} parent=5 // pred_check_branch
      %165 = sbr.rel (%p162) target = $region12
    $region11: #{norm_conv2d.1} parent=5 // pred_region
      %s166 = ssub.s32 %s10, 1
      // Predicated region
      $region13: #{norm_conv2d.1} parent=11 // pred_check
        %p167 = pneg %p103
      $region14: #{norm_conv2d.1} parent=11 // pred_check_branch
        %169 = sbr.rel (%p167) target = $region16
      $region15: #{norm_conv2d.1} parent=11 // pred_region
        _
      $region16: #{norm_conv2d.1} parent=11 // pred_fallthru
        _
      // Predicated region
      $region17: #{norm_conv2d.1} parent=11 // pred_check
        %p170 = pneg %p124
      $region18: #{norm_conv2d.1} parent=11 // pred_check_branch
        %172 = sbr.rel (%p170) target = $region20
      $region19: #{norm_conv2d.1} parent=11 // pred_region
        _
      $region20: #{norm_conv2d.1} parent=11 // pred_fallthru
        _
    $region12: #{norm_conv2d.1} parent=5 // pred_fallthru
      _
    %p173 = scmp.lt.s32.totalorder %s10, 2
    // Predicated region
    $region21: #{norm_conv2d.1} parent=5 // pred_check
      %p174 = pneg %p173
    $region22: #{norm_conv2d.1} parent=5 // pred_check_branch
      %176 = sbr.rel (%p174) target = $region24
    $region23: #{norm_conv2d.1} parent=5 // pred_region
      // Predicated region
      $region25: #{norm_conv2d.1} parent=23 // pred_check
        %p177 = pneg %p44
      $region26: #{norm_conv2d.1} parent=23 // pred_check_branch
        %179 = sbr.rel (%p177) target = $region28
      $region27: #{norm_conv2d.1} parent=23 // pred_region
        %s180 = smul.u32 3, %s18
        %p181 = scmp.lt.s32.totalorder %s17, 1
        %s182 = scalar_select %p181, %s17, 1
        %p183 = scmp.lt.s32.totalorder %s180, 5
        %s184 = scalar_select %p183, %s180, 5
        %s185 = smul.addr %s182, 6
        %s186 = sadd.s32 %s184, %s185
        %s187 = smul.addr %s186, 4
        %s188 = scalar_lea.vmem %s0, %s187
        %s189 = smul.u32 3, %s18
      $region28: #{norm_conv2d.1} parent=23 // pred_fallthru
        _
      // Predicated region
      $region29: #{norm_conv2d.1} parent=23 // pred_check
        %p190 = pneg %p76
      $region30: #{norm_conv2d.1} parent=23 // pred_check_branch
        %192 = sbr.rel (%p190) target = $region32
      $region31: #{norm_conv2d.1} parent=23 // pred_region
        %s193 = sadd.s32 %s18, 1
        %s194 = smul.u32 %s193, 3
        %p195 = scmp.lt.s32.totalorder %s17, 1
        %s196 = scalar_select %p195, %s17, 1
        %p197 = scmp.lt.s32.totalorder %s194, 5
        %s198 = scalar_select %p197, %s194, 5
        %s199 = smul.addr %s196, 6
        %s200 = sadd.s32 %s198, %s199
        %s201 = smul.addr %s200, 4
        %s202 = scalar_lea.vmem %s1, %s201
        %s203 = sadd.s32 %s18, 1
        %s204 = smul.u32 %s203, 3
      $region32: #{norm_conv2d.1} parent=23 // pred_fallthru
        _
    $region24: #{norm_conv2d.1} parent=5 // pred_fallthru
      _
    %p205 = scmp.le.s32.totalorder 1, %s10
    %p206 = scmp.lt.s32.totalorder %s10, 3
    %p207 = pnand %p205, %p206
    %p208 = pneg %p207
    // Predicated region
    $region33: #{norm_conv2d.1} parent=5 // pred_check
      _
    $region34: #{norm_conv2d.1} parent=5 // pred_check_branch
      %210 = sbr.rel (%p207) target = $region36
    $region35: #{norm_conv2d.1} parent=5 // pred_region
      %s211 = ssub.s32 %s10, 1
      %s212 = smul.u32 3, %s20
      %p213 = scmp.lt.s32.totalorder %s19, 1
      %s214 = scalar_select %p213, %s19, 1
      %p215 = scmp.lt.s32.totalorder %s212, 5
      %s216 = scalar_select %p215, %s212, 5
      %s217 = smul.addr %s214, 6
      %s218 = sadd.s32 %s216, %s217
      %s219 = smul.addr %s218, 4
      %s220 = scalar_lea.vmem %s0, %s219
      %p221 = pneg %p50
      %p222 = pneg %p47
      %s223 = sadd.s32 %s20, 1
      %s224 = smul.u32 %s223, 3
      %p225 = scmp.lt.s32.totalorder %s19, 1
      %s226 = scalar_select %p225, %s19, 1
      %p227 = scmp.lt.s32.totalorder %s224, 5
      %s228 = scalar_select %p227, %s224, 5
      %s229 = smul.addr %s226, 6
      %s230 = sadd.s32 %s228, %s229
      %s231 = smul.addr %s230, 4
      %s232 = scalar_lea.vmem %s1, %s231
      %p233 = pneg %p82
      %p234 = pneg %p79
      %p235 = pneg %p103
      %p236 = pneg %p100
      %p237 = pneg %p124
      %p238 = pneg %p121
      %p239 = pneg %p152
      %p240 = pneg %p149
      %s241 = smul.u32 3, %s20
      %p242 = scmp.lt.s32.totalorder %s19, 1
      %s243 = scalar_select %p242, %s19, 1
      %p244 = scmp.lt.s32.totalorder %s241, 2
      %s245 = scalar_select %p244, %s241, 2
      %s246 = smul.addr %s243, 3
      %s247 = sadd.s32 %s245, %s246
      %s248 = smul.addr %s247, 8
      %s249 = scalar_lea.vmem %s4, %s248
      %s250 = smul.u32 3, %s20
      %p251 = scmp.lt.s32.totalorder %s19, 1
      %s252 = scalar_select %p251, %s19, 1
      %p253 = scmp.lt.s32.totalorder %s250, 5
      %s254 = scalar_select %p253, %s250, 5
      %s255 = smul.addr %s252, 6
      %s256 = sadd.s32 %s254, %s255
      %s257 = smul.addr %s256, 4
      %s258 = scalar_lea.vmem %s0, %s257
      %s259 = smul.u32 3, %s20
      %s260 = sadd.s32 %s20, 1
      %s261 = smul.u32 %s260, 3
      %p262 = scmp.lt.s32.totalorder %s19, 1
      %s263 = scalar_select %p262, %s19, 1
      %p264 = scmp.lt.s32.totalorder %s261, 5
      %s265 = scalar_select %p264, %s261, 5
      %s266 = smul.addr %s263, 6
      %s267 = sadd.s32 %s265, %s266
      %s268 = smul.addr %s267, 4
      %s269 = scalar_lea.vmem %s1, %s268
      %s270 = sadd.s32 %s20, 1
      %s271 = smul.u32 %s270, 3
      %s272 = smul.u32 3, %s20
      %p273 = scmp.lt.s32.totalorder %s19, 1
      %s274 = scalar_select %p273, %s19, 1
      %p275 = scmp.lt.s32.totalorder %s272, 2
      %s276 = scalar_select %p275, %s272, 2
      %s277 = smul.addr %s274, 3
      %s278 = sadd.s32 %s276, %s277
      %s279 = smul.addr %s278, 8
      %s280 = scalar_lea.vmem %s4, %s279
      %s281 = smul.u32 3, %s20
      %v282 = vld [vmem:[%s258] sm:$0xff]
      %v283 = vld [vmem:[%s258 + $0x8] sm:$0xf]
      %v284 = vld [vmem:[%s269] sm:$0xf]
      %v287 = vcombine.high %v282, %v282
      %v288 = vld [vmem:[%s2] sm:$0xff]
      %v289 = vld [vmem:[%s3] sm:$0xff]
      %291 = vset.pattern.permute.xlu0 0
      %292 = vperm.xlu0 %291, %v289
      %v293 = vpop.permute.xlu0 %292
      %vm295 = vcmask 31744
      %v297 = vsel %vm295, %v288, 0
      %vm299 = vcmask 1043456
      %v300 = vsel %vm299, %v282, 0
      %v302 = vsel %vm299, %v287, 0
      %v304 = vsel %vm299, %v283, 0
      %306 = vmatprep.subr.mxu0 0.0
      %307 = vmatpush1.msra.mxu0 0.0
      %308 = vmatprep.subr.mxu0 0.0
      %309 = vmatpush1.msra.mxu0 0.0
      %310 = vmatprep.subr.mxu0 0.0
      %311 = vmatpush1.msra.mxu0 0.0
      %312 = vmatprep.subr.mxu0 0.0
      %313 = vmatpush1.msra.mxu0 0.0
      %314 = vmatprep.subr.mxu0 0.0
      %315 = vmatpush1.msra.mxu0 0.0
      %316 = vmatprep.subr.mxu0 0.0
      %317 = vmatpush1.msra.mxu0 0.0
      %318 = vmatprep.subr.mxu0 0.0
      %319 = vmatpush1.msra.mxu0 0.0
      %320 = vmatprep.subr.mxu0 0.0
      %321 = vmatpush1.msra.mxu0 0.0
      %322 = vmatprep.subr.mxu0 0.0
      %323 = vmatpush1.msra.mxu0 0.0
      %324 = vmatprep.subr.mxu0 0.0
      %325 = vmatpush1.msra.mxu0 0.0
      %326 = vmatprep.subr.mxu0 0.0
      %327 = vmatpush1.msra.mxu0 0.0
      %328 = vmatprep.subr.mxu0 0.0
      %329 = vmatpush1.msra.mxu0 0.0
      %330 = vmatprep.subr.mxu0 0.0
      %331 = vmatpush1.msra.mxu0 0.0
      %332 = vmatprep.subr.mxu0 0.0
      %333 = vmatpush1.msra.mxu0 0.0
      %334 = vmatprep.subr.mxu0 0.0
      %335 = vmatpush1.msra.mxu0 0.0
      %336 = vmatprep.subr.mxu0 %v302
      %337 = vmatpush1.msra.mxu0 %v300
      %338 = vmatprep.subr.mxu0 0.0
      %339 = vmatpush2.msra.mxu0 0.0
      %340 = vmatprep.subr.mxu0 0.0
      %341 = vmatpush2.msra.mxu0 0.0
      %342 = vmatprep.subr.mxu0 0.0
      %343 = vmatpush2.msra.mxu0 0.0
      %344 = vmatprep.subr.mxu0 0.0
      %345 = vmatpush2.msra.mxu0 0.0
      %346 = vmatprep.subr.mxu0 0.0
      %347 = vmatpush2.msra.mxu0 0.0
      %348 = vmatprep.subr.mxu0 0.0
      %349 = vmatpush2.msra.mxu0 0.0
      %350 = vmatprep.subr.mxu0 0.0
      %351 = vmatpush2.msra.mxu0 0.0
      %352 = vmatprep.subr.mxu0 0.0
      %353 = vmatpush2.msra.mxu0 0.0
      %354 = vmatprep.subr.mxu0 0.0
      %355 = vmatpush2.msra.mxu0 0.0
      %356 = vmatprep.subr.mxu0 0.0
      %357 = vmatpush2.msra.mxu0 0.0
      %358 = vmatprep.subr.mxu0 0.0
      %359 = vmatpush2.msra.mxu0 0.0
      %360 = vmatprep.subr.mxu0 0.0
      %361 = vmatpush2.msra.mxu0 0.0
      %362 = vmatprep.subr.mxu0 0.0
      %363 = vmatpush2.msra.mxu0 0.0
      %364 = vmatprep.subr.mxu0 0.0
      %365 = vmatpush2.msra.mxu0 0.0
      %366 = vmatprep.subr.mxu0 0.0
      %367 = vmatpush2.msra.mxu0 0.0
      %368 = vmatprep.subr.mxu0 0.0
      %369 = vmatpush2.msra.mxu0 0.0
      %370 = vmatprep.mubr.f32.mxu0 0.0
      %371 = vmatmul.mubr.f32.gmra.mxu0 %v297
      %v372 = vpop.f32.mrf.mxu0
      %v373 = vadd.f32 %v293, %v372
      %v374 = vpop.f32.mrf.mxu0
      %v375 = vadd.f32 %v293, %v374
      %376 = vdwg.mxu0
      %377 = vmatprep.subr.mxu0 0.0
      %378 = vmatpush1.msra.mxu0 0.0
      %379 = vmatprep.subr.mxu0 0.0
      %380 = vmatpush1.msra.mxu0 0.0
      %381 = vmatprep.subr.mxu0 0.0
      %382 = vmatpush1.msra.mxu0 0.0
      %383 = vmatprep.subr.mxu0 0.0
      %384 = vmatpush1.msra.mxu0 0.0
      %385 = vmatprep.subr.mxu0 0.0
      %386 = vmatpush1.msra.mxu0 0.0
      %387 = vmatprep.subr.mxu0 0.0
      %388 = vmatpush1.msra.mxu0 0.0
      %389 = vmatprep.subr.mxu0 0.0
      %390 = vmatpush1.msra.mxu0 0.0
      %391 = vmatprep.subr.mxu0 0.0
      %392 = vmatpush1.msra.mxu0 0.0
      %393 = vmatprep.subr.mxu0 0.0
      %394 = vmatpush1.msra.mxu0 0.0
      %395 = vmatprep.subr.mxu0 0.0
      %396 = vmatpush1.msra.mxu0 0.0
      %397 = vmatprep.subr.mxu0 0.0
      %398 = vmatpush1.msra.mxu0 0.0
      %399 = vmatprep.subr.mxu0 0.0
      %400 = vmatpush1.msra.mxu0 0.0
      %401 = vmatprep.subr.mxu0 0.0
      %402 = vmatpush1.msra.mxu0 0.0
      %403 = vmatprep.subr.mxu0 0.0
      %404 = vmatpush1.msra.mxu0 0.0
      %405 = vmatprep.subr.mxu0 0.0
      %406 = vmatpush1.msra.mxu0 0.0
      %407 = vmatprep.subr.mxu0 0.0
      %408 = vmatpush1.msra.mxu0 %v304
      %409 = vmatprep.subr.mxu0 0.0
      %410 = vmatpush2.msra.mxu0 0.0
      %411 = vmatprep.subr.mxu0 0.0
      %412 = vmatpush2.msra.mxu0 0.0
      %413 = vmatprep.subr.mxu0 0.0
      %414 = vmatpush2.msra.mxu0 0.0
      %415 = vmatprep.subr.mxu0 0.0
      %416 = vmatpush2.msra.mxu0 0.0
      %417 = vmatprep.subr.mxu0 0.0
      %418 = vmatpush2.msra.mxu0 0.0
      %419 = vmatprep.subr.mxu0 0.0
      %420 = vmatpush2.msra.mxu0 0.0
      %421 = vmatprep.subr.mxu0 0.0
      %422 = vmatpush2.msra.mxu0 0.0
      %423 = vmatprep.subr.mxu0 0.0
      %424 = vmatpush2.msra.mxu0 0.0
      %425 = vmatprep.subr.mxu0 0.0
      %426 = vmatpush2.msra.mxu0 0.0
      %427 = vmatprep.subr.mxu0 0.0
      %428 = vmatpush2.msra.mxu0 0.0
      %429 = vmatprep.subr.mxu0 0.0
      %430 = vmatpush2.msra.mxu0 0.0
      %431 = vmatprep.subr.mxu0 0.0
      %432 = vmatpush2.msra.mxu0 0.0
      %433 = vmatprep.subr.mxu0 0.0
      %434 = vmatpush2.msra.mxu0 0.0
      %435 = vmatprep.subr.mxu0 0.0
      %436 = vmatpush2.msra.mxu0 0.0
      %437 = vmatprep.subr.mxu0 0.0
      %438 = vmatpush2.msra.mxu0 0.0
      %439 = vmatprep.subr.mxu0 0.0
      %440 = vmatpush2.msra.mxu0 0.0
      %441 = vmatprep.mubr.f32.mxu0 0.0
      %442 = vmatmul.mubr.f32.gmra.mxu0 %v297
      %v443 = vpop.f32.mrf.mxu0
      %v444 = vadd.f32 %v293, %v443
      %v445 = vpop.f32.mrf.mxu0
      %446 = vdwg.mxu0
      %s447 = scalar_lea.vmem %s2, 8
      %v448 = vld [vmem:[%s447] sm:$0xff]
      %450 = vrot.lane.b32.xlu0 %v282, 127
      %v451 = vpop.permute.xlu0 %450
      %452 = vrot.lane.b32.xlu0 %v287, 127
      %v453 = vpop.permute.xlu0 %452
      %454 = vrot.lane.b32.xlu0 %v283, 127
      %v455 = vpop.permute.xlu0 %454
      %456 = vrot.lane.b32.xlu0 %v284, 127
      %v457 = vpop.permute.xlu0 %456
      %vm458 = vcmask 1039360
      %v459 = vsel %vm458, %v451, %v453
      %v460 = vsel %vm458, %v453, %v455
      %v461 = vsel %vm458, %v455, %v457
      %v463 = vsel %vm295, %v448, 0
      %v465 = vsel %vm299, %v459, 0
      %v467 = vsel %vm299, %v460, 0
      %v469 = vsel %vm299, %v461, 0
      %471 = vmatprep.subr.mxu0 0.0
      %472 = vmatpush1.msra.mxu0 0.0
      %473 = vmatprep.subr.mxu0 0.0
      %474 = vmatpush1.msra.mxu0 0.0
      %475 = vmatprep.subr.mxu0 0.0
      %476 = vmatpush1.msra.mxu0 0.0
      %477 = vmatprep.subr.mxu0 0.0
      %478 = vmatpush1.msra.mxu0 0.0
      %479 = vmatprep.subr.mxu0 0.0
      %480 = vmatpush1.msra.mxu0 0.0
      %481 = vmatprep.subr.mxu0 0.0
      %482 = vmatpush1.msra.mxu0 0.0
      %483 = vmatprep.subr.mxu0 0.0
      %484 = vmatpush1.msra.mxu0 0.0
      %485 = vmatprep.subr.mxu0 0.0
      %486 = vmatpush1.msra.mxu0 0.0
      %487 = vmatprep.subr.mxu0 0.0
      %488 = vmatpush1.msra.mxu0 0.0
      %489 = vmatprep.subr.mxu0 0.0
      %490 = vmatpush1.msra.mxu0 0.0
      %491 = vmatprep.subr.mxu0 0.0
      %492 = vmatpush1.msra.mxu0 0.0
      %493 = vmatprep.subr.mxu0 0.0
      %494 = vmatpush1.msra.mxu0 0.0
      %495 = vmatprep.subr.mxu0 0.0
      %496 = vmatpush1.msra.mxu0 0.0
      %497 = vmatprep.subr.mxu0 0.0
      %498 = vmatpush1.msra.mxu0 0.0
      %499 = vmatprep.subr.mxu0 0.0
      %500 = vmatpush1.msra.mxu0 0.0
      %501 = vmatprep.subr.mxu0 %v467
      %502 = vmatpush1.msra.mxu0 %v465
      %503 = vmatprep.subr.mxu0 0.0
      %504 = vmatpush2.msra.mxu0 0.0
      %505 = vmatprep.subr.mxu0 0.0
      %506 = vmatpush2.msra.mxu0 0.0
      %507 = vmatprep.subr.mxu0 0.0
      %508 = vmatpush2.msra.mxu0 0.0
      %509 = vmatprep.subr.mxu0 0.0
      %510 = vmatpush2.msra.mxu0 0.0
      %511 = vmatprep.subr.mxu0 0.0
      %512 = vmatpush2.msra.mxu0 0.0
      %513 = vmatprep.subr.mxu0 0.0
      %514 = vmatpush2.msra.mxu0 0.0
      %515 = vmatprep.subr.mxu0 0.0
      %516 = vmatpush2.msra.mxu0 0.0
      %517 = vmatprep.subr.mxu0 0.0
      %518 = vmatpush2.msra.mxu0 0.0
      %519 = vmatprep.subr.mxu0 0.0
      %520 = vmatpush2.msra.mxu0 0.0
      %521 = vmatprep.subr.mxu0 0.0
      %522 = vmatpush2.msra.mxu0 0.0
      %523 = vmatprep.subr.mxu0 0.0
      %524 = vmatpush2.msra.mxu0 0.0
      %525 = vmatprep.subr.mxu0 0.0
      %526 = vmatpush2.msra.mxu0 0.0
      %527 = vmatprep.subr.mxu0 0.0
      %528 = vmatpush2.msra.mxu0 0.0
      %529 = vmatprep.subr.mxu0 0.0
      %530 = vmatpush2.msra.mxu0 0.0
      %531 = vmatprep.subr.mxu0 0.0
      %532 = vmatpush2.msra.mxu0 0.0
      %533 = vmatprep.subr.mxu0 0.0
      %534 = vmatpush2.msra.mxu0 0.0
      %535 = vmatprep.mubr.f32.mxu0 0.0
      %536 = vmatmul.mubr.f32.gmra.mxu0 %v463
      %v537 = vpop.f32.mrf.mxu0
      %v538 = vadd.f32 0.0, %v537
      %v539 = vpop.f32.mrf.mxu0
      %v540 = vadd.f32 0.0, %v539
      %541 = vdwg.mxu0
      %542 = vmatprep.subr.mxu0 0.0
      %543 = vmatpush1.msra.mxu0 0.0
      %544 = vmatprep.subr.mxu0 0.0
      %545 = vmatpush1.msra.mxu0 0.0
      %546 = vmatprep.subr.mxu0 0.0
      %547 = vmatpush1.msra.mxu0 0.0
      %548 = vmatprep.subr.mxu0 0.0
      %549 = vmatpush1.msra.mxu0 0.0
      %550 = vmatprep.subr.mxu0 0.0
      %551 = vmatpush1.msra.mxu0 0.0
      %552 = vmatprep.subr.mxu0 0.0
      %553 = vmatpush1.msra.mxu0 0.0
      %554 = vmatprep.subr.mxu0 0.0
      %555 = vmatpush1.msra.mxu0 0.0
      %556 = vmatprep.subr.mxu0 0.0
      %557 = vmatpush1.msra.mxu0 0.0
      %558 = vmatprep.subr.mxu0 0.0
      %559 = vmatpush1.msra.mxu0 0.0
      %560 = vmatprep.subr.mxu0 0.0
      %561 = vmatpush1.msra.mxu0 0.0
      %562 = vmatprep.subr.mxu0 0.0
      %563 = vmatpush1.msra.mxu0 0.0
      %564 = vmatprep.subr.mxu0 0.0
      %565 = vmatpush1.msra.mxu0 0.0
      %566 = vmatprep.subr.mxu0 0.0
      %567 = vmatpush1.msra.mxu0 0.0
      %568 = vmatprep.subr.mxu0 0.0
      %569 = vmatpush1.msra.mxu0 0.0
      %570 = vmatprep.subr.mxu0 0.0
      %571 = vmatpush1.msra.mxu0 0.0
      %572 = vmatprep.subr.mxu0 0.0
      %573 = vmatpush1.msra.mxu0 %v469
      %574 = vmatprep.subr.mxu0 0.0
      %575 = vmatpush2.msra.mxu0 0.0
      %576 = vmatprep.subr.mxu0 0.0
      %577 = vmatpush2.msra.mxu0 0.0
      %578 = vmatprep.subr.mxu0 0.0
      %579 = vmatpush2.msra.mxu0 0.0
      %580 = vmatprep.subr.mxu0 0.0
      %581 = vmatpush2.msra.mxu0 0.0
      %582 = vmatprep.subr.mxu0 0.0
      %583 = vmatpush2.msra.mxu0 0.0
      %584 = vmatprep.subr.mxu0 0.0
      %585 = vmatpush2.msra.mxu0 0.0
      %586 = vmatprep.subr.mxu0 0.0
      %587 = vmatpush2.msra.mxu0 0.0
      %588 = vmatprep.subr.mxu0 0.0
      %589 = vmatpush2.msra.mxu0 0.0
      %590 = vmatprep.subr.mxu0 0.0
      %591 = vmatpush2.msra.mxu0 0.0
      %592 = vmatprep.subr.mxu0 0.0
      %593 = vmatpush2.msra.mxu0 0.0
      %594 = vmatprep.subr.mxu0 0.0
      %595 = vmatpush2.msra.mxu0 0.0
      %596 = vmatprep.subr.mxu0 0.0
      %597 = vmatpush2.msra.mxu0 0.0
      %598 = vmatprep.subr.mxu0 0.0
      %599 = vmatpush2.msra.mxu0 0.0
      %600 = vmatprep.subr.mxu0 0.0
      %601 = vmatpush2.msra.mxu0 0.0
      %602 = vmatprep.subr.mxu0 0.0
      %603 = vmatpush2.msra.mxu0 0.0
      %604 = vmatprep.subr.mxu0 0.0
      %605 = vmatpush2.msra.mxu0 0.0
      %606 = vmatprep.mubr.f32.mxu0 0.0
      %607 = vmatmul.mubr.f32.gmra.mxu0 %v463
      %v608 = vpop.f32.mrf.mxu0
      %v609 = vadd.f32 0.0, %v608
      %v610 = vpop.f32.mrf.mxu0
      %611 = vdwg.mxu0
      %v612 = vadd.f32 %v373, %v538
      %v613 = vadd.f32 %v375, %v540
      %v614 = vadd.f32 %v444, %v609
      %s615 = scalar_lea.vmem %s2, 16
      %v616 = vld [vmem:[%s615] sm:$0xff]
      %617 = vrot.lane.b32.xlu0 %v282, 126
      %v618 = vpop.permute.xlu0 %617
      %619 = vrot.lane.b32.xlu0 %v287, 126
      %v620 = vpop.permute.xlu0 %619
      %621 = vrot.lane.b32.xlu0 %v283, 126
      %v622 = vpop.permute.xlu0 %621
      %623 = vrot.lane.b32.xlu0 %v284, 126
      %v624 = vpop.permute.xlu0 %623
      %vm625 = vcmask 1031168
      %v626 = vsel %vm625, %v618, %v620
      %v627 = vsel %vm625, %v620, %v622
      %v628 = vsel %vm625, %v622, %v624
      %v630 = vsel %vm295, %v616, 0
      %v632 = vsel %vm299, %v626, 0
      %v634 = vsel %vm299, %v627, 0
      %v636 = vsel %vm299, %v628, 0
      %638 = vmatprep.subr.mxu0 0.0
      %639 = vmatpush1.msra.mxu0 0.0
      %640 = vmatprep.subr.mxu0 0.0
      %641 = vmatpush1.msra.mxu0 0.0
      %642 = vmatprep.subr.mxu0 0.0
      %643 = vmatpush1.msra.mxu0 0.0
      %644 = vmatprep.subr.mxu0 0.0
      %645 = vmatpush1.msra.mxu0 0.0
      %646 = vmatprep.subr.mxu0 0.0
      %647 = vmatpush1.msra.mxu0 0.0
      %648 = vmatprep.subr.mxu0 0.0
      %649 = vmatpush1.msra.mxu0 0.0
      %650 = vmatprep.subr.mxu0 0.0
      %651 = vmatpush1.msra.mxu0 0.0
      %652 = vmatprep.subr.mxu0 0.0
      %653 = vmatpush1.msra.mxu0 0.0
      %654 = vmatprep.subr.mxu0 0.0
      %655 = vmatpush1.msra.mxu0 0.0
      %656 = vmatprep.subr.mxu0 0.0
      %657 = vmatpush1.msra.mxu0 0.0
      %658 = vmatprep.subr.mxu0 0.0
      %659 = vmatpush1.msra.mxu0 0.0
      %660 = vmatprep.subr.mxu0 0.0
      %661 = vmatpush1.msra.mxu0 0.0
      %662 = vmatprep.subr.mxu0 0.0
      %663 = vmatpush1.msra.mxu0 0.0
      %664 = vmatprep.subr.mxu0 0.0
      %665 = vmatpush1.msra.mxu0 0.0
      %666 = vmatprep.subr.mxu0 0.0
      %667 = vmatpush1.msra.mxu0 0.0
      %668 = vmatprep.subr.mxu0 %v634
      %669 = vmatpush1.msra.mxu0 %v632
      %670 = vmatprep.subr.mxu0 0.0
      %671 = vmatpush2.msra.mxu0 0.0
      %672 = vmatprep.subr.mxu0 0.0
      %673 = vmatpush2.msra.mxu0 0.0
      %674 = vmatprep.subr.mxu0 0.0
      %675 = vmatpush2.msra.mxu0 0.0
      %676 = vmatprep.subr.mxu0 0.0
      %677 = vmatpush2.msra.mxu0 0.0
      %678 = vmatprep.subr.mxu0 0.0
      %679 = vmatpush2.msra.mxu0 0.0
      %680 = vmatprep.subr.mxu0 0.0
      %681 = vmatpush2.msra.mxu0 0.0
      %682 = vmatprep.subr.mxu0 0.0
      %683 = vmatpush2.msra.mxu0 0.0
      %684 = vmatprep.subr.mxu0 0.0
      %685 = vmatpush2.msra.mxu0 0.0
      %686 = vmatprep.subr.mxu0 0.0
      %687 = vmatpush2.msra.mxu0 0.0
      %688 = vmatprep.subr.mxu0 0.0
      %689 = vmatpush2.msra.mxu0 0.0
      %690 = vmatprep.subr.mxu0 0.0
      %691 = vmatpush2.msra.mxu0 0.0
      %692 = vmatprep.subr.mxu0 0.0
      %693 = vmatpush2.msra.mxu0 0.0
      %694 = vmatprep.subr.mxu0 0.0
      %695 = vmatpush2.msra.mxu0 0.0
      %696 = vmatprep.subr.mxu0 0.0
      %697 = vmatpush2.msra.mxu0 0.0
      %698 = vmatprep.subr.mxu0 0.0
      %699 = vmatpush2.msra.mxu0 0.0
      %700 = vmatprep.subr.mxu0 0.0
      %701 = vmatpush2.msra.mxu0 0.0
      %702 = vmatprep.mubr.f32.mxu0 0.0
      %703 = vmatmul.mubr.f32.gmra.mxu0 %v630
      %v704 = vpop.f32.mrf.mxu0
      %v705 = vadd.f32 0.0, %v704
      %v706 = vpop.f32.mrf.mxu0
      %v707 = vadd.f32 0.0, %v706
      %708 = vdwg.mxu0
      %709 = vmatprep.subr.mxu0 0.0
      %710 = vmatpush1.msra.mxu0 0.0
      %711 = vmatprep.subr.mxu0 0.0
      %712 = vmatpush1.msra.mxu0 0.0
      %713 = vmatprep.subr.mxu0 0.0
      %714 = vmatpush1.msra.mxu0 0.0
      %715 = vmatprep.subr.mxu0 0.0
      %716 = vmatpush1.msra.mxu0 0.0
      %717 = vmatprep.subr.mxu0 0.0
      %718 = vmatpush1.msra.mxu0 0.0
      %719 = vmatprep.subr.mxu0 0.0
      %720 = vmatpush1.msra.mxu0 0.0
      %721 = vmatprep.subr.mxu0 0.0
      %722 = vmatpush1.msra.mxu0 0.0
      %723 = vmatprep.subr.mxu0 0.0
      %724 = vmatpush1.msra.mxu0 0.0
      %725 = vmatprep.subr.mxu0 0.0
      %726 = vmatpush1.msra.mxu0 0.0
      %727 = vmatprep.subr.mxu0 0.0
      %728 = vmatpush1.msra.mxu0 0.0
      %729 = vmatprep.subr.mxu0 0.0
      %730 = vmatpush1.msra.mxu0 0.0
      %731 = vmatprep.subr.mxu0 0.0
      %732 = vmatpush1.msra.mxu0 0.0
      %733 = vmatprep.subr.mxu0 0.0
      %734 = vmatpush1.msra.mxu0 0.0
      %735 = vmatprep.subr.mxu0 0.0
      %736 = vmatpush1.msra.mxu0 0.0
      %737 = vmatprep.subr.mxu0 0.0
      %738 = vmatpush1.msra.mxu0 0.0
      %739 = vmatprep.subr.mxu0 0.0
      %740 = vmatpush1.msra.mxu0 %v636
      %741 = vmatprep.subr.mxu0 0.0
      %742 = vmatpush2.msra.mxu0 0.0
      %743 = vmatprep.subr.mxu0 0.0
      %744 = vmatpush2.msra.mxu0 0.0
      %745 = vmatprep.subr.mxu0 0.0
      %746 = vmatpush2.msra.mxu0 0.0
      %747 = vmatprep.subr.mxu0 0.0
      %748 = vmatpush2.msra.mxu0 0.0
      %749 = vmatprep.subr.mxu0 0.0
      %750 = vmatpush2.msra.mxu0 0.0
      %751 = vmatprep.subr.mxu0 0.0
      %752 = vmatpush2.msra.mxu0 0.0
      %753 = vmatprep.subr.mxu0 0.0
      %754 = vmatpush2.msra.mxu0 0.0
      %755 = vmatprep.subr.mxu0 0.0
      %756 = vmatpush2.msra.mxu0 0.0
      %757 = vmatprep.subr.mxu0 0.0
      %758 = vmatpush2.msra.mxu0 0.0
      %759 = vmatprep.subr.mxu0 0.0
      %760 = vmatpush2.msra.mxu0 0.0
      %761 = vmatprep.subr.mxu0 0.0
      %762 = vmatpush2.msra.mxu0 0.0
      %763 = vmatprep.subr.mxu0 0.0
      %764 = vmatpush2.msra.mxu0 0.0
      %765 = vmatprep.subr.mxu0 0.0
      %766 = vmatpush2.msra.mxu0 0.0
      %767 = vmatprep.subr.mxu0 0.0
      %768 = vmatpush2.msra.mxu0 0.0
      %769 = vmatprep.subr.mxu0 0.0
      %770 = vmatpush2.msra.mxu0 0.0
      %771 = vmatprep.subr.mxu0 0.0
      %772 = vmatpush2.msra.mxu0 0.0
      %773 = vmatprep.mubr.f32.mxu0 0.0
      %774 = vmatmul.mubr.f32.gmra.mxu0 %v630
      %v775 = vpop.f32.mrf.mxu0
      %v776 = vadd.f32 0.0, %v775
      %v777 = vpop.f32.mrf.mxu0
      %778 = vdwg.mxu0
      %v779 = vadd.f32 %v612, %v705
      %v780 = vadd.f32 %v613, %v707
      %v781 = vadd.f32 %v614, %v776
      %s782 = scalar_lea.vmem %s2, 24
      %v783 = vld [vmem:[%s782] sm:$0xff]
      %784 = vrot.lane.b32.xlu0 %v282, 110
      %v785 = vpop.permute.xlu0 %784
      %786 = vrot.lane.b32.xlu0 %v287, 110
      %v787 = vpop.permute.xlu0 %786
      %788 = vrot.lane.b32.xlu0 %v283, 110
      %v789 = vpop.permute.xlu0 %788
      %790 = vrot.lane.b32.xlu0 %v284, 110
      %v791 = vpop.permute.xlu0 %790
      %vm792 = vcmask 900096
      %v793 = vsel %vm792, %v785, %v787
      %v794 = vsel %vm792, %v787, %v789
      %v795 = vsel %vm792, %v789, %v791
      %v797 = vsel %vm295, %v783, 0
      %v799 = vsel %vm299, %v793, 0
      %v801 = vsel %vm299, %v794, 0
      %v803 = vsel %vm299, %v795, 0
      %805 = vmatprep.subr.mxu0 0.0
      %806 = vmatpush1.msra.mxu0 0.0
      %807 = vmatprep.subr.mxu0 0.0
      %808 = vmatpush1.msra.mxu0 0.0
      %809 = vmatprep.subr.mxu0 0.0
      %810 = vmatpush1.msra.mxu0 0.0
      %811 = vmatprep.subr.mxu0 0.0
      %812 = vmatpush1.msra.mxu0 0.0
      %813 = vmatprep.subr.mxu0 0.0
      %814 = vmatpush1.msra.mxu0 0.0
      %815 = vmatprep.subr.mxu0 0.0
      %816 = vmatpush1.msra.mxu0 0.0
      %817 = vmatprep.subr.mxu0 0.0
      %818 = vmatpush1.msra.mxu0 0.0
      %819 = vmatprep.subr.mxu0 0.0
      %820 = vmatpush1.msra.mxu0 0.0
      %821 = vmatprep.subr.mxu0 0.0
      %822 = vmatpush1.msra.mxu0 0.0
      %823 = vmatprep.subr.mxu0 0.0
      %824 = vmatpush1.msra.mxu0 0.0
      %825 = vmatprep.subr.mxu0 0.0
      %826 = vmatpush1.msra.mxu0 0.0
      %827 = vmatprep.subr.mxu0 0.0
      %828 = vmatpush1.msra.mxu0 0.0
      %829 = vmatprep.subr.mxu0 0.0
      %830 = vmatpush1.msra.mxu0 0.0
      %831 = vmatprep.subr.mxu0 0.0
      %832 = vmatpush1.msra.mxu0 0.0
      %833 = vmatprep.subr.mxu0 0.0
      %834 = vmatpush1.msra.mxu0 0.0
      %835 = vmatprep.subr.mxu0 %v801
      %836 = vmatpush1.msra.mxu0 %v799
      %837 = vmatprep.subr.mxu0 0.0
      %838 = vmatpush2.msra.mxu0 0.0
      %839 = vmatprep.subr.mxu0 0.0
      %840 = vmatpush2.msra.mxu0 0.0
      %841 = vmatprep.subr.mxu0 0.0
      %842 = vmatpush2.msra.mxu0 0.0
      %843 = vmatprep.subr.mxu0 0.0
      %844 = vmatpush2.msra.mxu0 0.0
      %845 = vmatprep.subr.mxu0 0.0
      %846 = vmatpush2.msra.mxu0 0.0
      %847 = vmatprep.subr.mxu0 0.0
      %848 = vmatpush2.msra.mxu0 0.0
      %849 = vmatprep.subr.mxu0 0.0
      %850 = vmatpush2.msra.mxu0 0.0
      %851 = vmatprep.subr.mxu0 0.0
      %852 = vmatpush2.msra.mxu0 0.0
      %853 = vmatprep.subr.mxu0 0.0
      %854 = vmatpush2.msra.mxu0 0.0
      %855 = vmatprep.subr.mxu0 0.0
      %856 = vmatpush2.msra.mxu0 0.0
      %857 = vmatprep.subr.mxu0 0.0
      %858 = vmatpush2.msra.mxu0 0.0
      %859 = vmatprep.subr.mxu0 0.0
      %860 = vmatpush2.msra.mxu0 0.0
      %861 = vmatprep.subr.mxu0 0.0
      %862 = vmatpush2.msra.mxu0 0.0
      %863 = vmatprep.subr.mxu0 0.0
      %864 = vmatpush2.msra.mxu0 0.0
      %865 = vmatprep.subr.mxu0 0.0
      %866 = vmatpush2.msra.mxu0 0.0
      %867 = vmatprep.subr.mxu0 0.0
      %868 = vmatpush2.msra.mxu0 0.0
      %869 = vmatprep.mubr.f32.mxu0 0.0
      %870 = vmatmul.mubr.f32.gmra.mxu0 %v797
      %v871 = vpop.f32.mrf.mxu0
      %v872 = vadd.f32 0.0, %v871
      %v873 = vpop.f32.mrf.mxu0
      %v874 = vadd.f32 0.0, %v873
      %875 = vdwg.mxu0
      %876 = vmatprep.subr.mxu0 0.0
      %877 = vmatpush1.msra.mxu0 0.0
      %878 = vmatprep.subr.mxu0 0.0
      %879 = vmatpush1.msra.mxu0 0.0
      %880 = vmatprep.subr.mxu0 0.0
      %881 = vmatpush1.msra.mxu0 0.0
      %882 = vmatprep.subr.mxu0 0.0
      %883 = vmatpush1.msra.mxu0 0.0
      %884 = vmatprep.subr.mxu0 0.0
      %885 = vmatpush1.msra.mxu0 0.0
      %886 = vmatprep.subr.mxu0 0.0
      %887 = vmatpush1.msra.mxu0 0.0
      %888 = vmatprep.subr.mxu0 0.0
      %889 = vmatpush1.msra.mxu0 0.0
      %890 = vmatprep.subr.mxu0 0.0
      %891 = vmatpush1.msra.mxu0 0.0
      %892 = vmatprep.subr.mxu0 0.0
      %893 = vmatpush1.msra.mxu0 0.0
      %894 = vmatprep.subr.mxu0 0.0
      %895 = vmatpush1.msra.mxu0 0.0
      %896 = vmatprep.subr.mxu0 0.0
      %897 = vmatpush1.msra.mxu0 0.0
      %898 = vmatprep.subr.mxu0 0.0
      %899 = vmatpush1.msra.mxu0 0.0
      %900 = vmatprep.subr.mxu0 0.0
      %901 = vmatpush1.msra.mxu0 0.0
      %902 = vmatprep.subr.mxu0 0.0
      %903 = vmatpush1.msra.mxu0 0.0
      %904 = vmatprep.subr.mxu0 0.0
      %905 = vmatpush1.msra.mxu0 0.0
      %906 = vmatprep.subr.mxu0 0.0
      %907 = vmatpush1.msra.mxu0 %v803
      %908 = vmatprep.subr.mxu0 0.0
      %909 = vmatpush2.msra.mxu0 0.0
      %910 = vmatprep.subr.mxu0 0.0
      %911 = vmatpush2.msra.mxu0 0.0
      %912 = vmatprep.subr.mxu0 0.0
      %913 = vmatpush2.msra.mxu0 0.0
      %914 = vmatprep.subr.mxu0 0.0
      %915 = vmatpush2.msra.mxu0 0.0
      %916 = vmatprep.subr.mxu0 0.0
      %917 = vmatpush2.msra.mxu0 0.0
      %918 = vmatprep.subr.mxu0 0.0
      %919 = vmatpush2.msra.mxu0 0.0
      %920 = vmatprep.subr.mxu0 0.0
      %921 = vmatpush2.msra.mxu0 0.0
      %922 = vmatprep.subr.mxu0 0.0
      %923 = vmatpush2.msra.mxu0 0.0
      %924 = vmatprep.subr.mxu0 0.0
      %925 = vmatpush2.msra.mxu0 0.0
      %926 = vmatprep.subr.mxu0 0.0
      %927 = vmatpush2.msra.mxu0 0.0
      %928 = vmatprep.subr.mxu0 0.0
      %929 = vmatpush2.msra.mxu0 0.0
      %930 = vmatprep.subr.mxu0 0.0
      %931 = vmatpush2.msra.mxu0 0.0
      %932 = vmatprep.subr.mxu0 0.0
      %933 = vmatpush2.msra.mxu0 0.0
      %934 = vmatprep.subr.mxu0 0.0
      %935 = vmatpush2.msra.mxu0 0.0
      %936 = vmatprep.subr.mxu0 0.0
      %937 = vmatpush2.msra.mxu0 0.0
      %938 = vmatprep.subr.mxu0 0.0
      %939 = vmatpush2.msra.mxu0 0.0
      %940 = vmatprep.mubr.f32.mxu0 0.0
      %941 = vmatmul.mubr.f32.gmra.mxu0 %v797
      %v942 = vpop.f32.mrf.mxu0
      %v943 = vadd.f32 0.0, %v942
      %v944 = vpop.f32.mrf.mxu0
      %945 = vdwg.mxu0
      %v946 = vadd.f32 %v779, %v872
      %v947 = vadd.f32 %v780, %v874
      %v948 = vadd.f32 %v781, %v943
      %s949 = scalar_lea.vmem %s2, 32
      %v950 = vld [vmem:[%s949] sm:$0xff]
      %951 = vrot.lane.b32.xlu0 %v282, 109
      %v952 = vpop.permute.xlu0 %951
      %953 = vrot.lane.b32.xlu0 %v287, 109
      %v954 = vpop.permute.xlu0 %953
      %955 = vrot.lane.b32.xlu0 %v283, 109
      %v956 = vpop.permute.xlu0 %955
      %957 = vrot.lane.b32.xlu0 %v284, 109
      %v958 = vpop.permute.xlu0 %957
      %vm959 = vcmask 891904
      %v960 = vsel %vm959, %v952, %v954
      %v961 = vsel %vm959, %v954, %v956
      %v962 = vsel %vm959, %v956, %v958
      %v964 = vsel %vm295, %v950, 0
      %v966 = vsel %vm299, %v960, 0
      %v968 = vsel %vm299, %v961, 0
      %v970 = vsel %vm299, %v962, 0
      %972 = vmatprep.subr.mxu0 0.0
      %973 = vmatpush1.msra.mxu0 0.0
      %974 = vmatprep.subr.mxu0 0.0
      %975 = vmatpush1.msra.mxu0 0.0
      %976 = vmatprep.subr.mxu0 0.0
      %977 = vmatpush1.msra.mxu0 0.0
      %978 = vmatprep.subr.mxu0 0.0
      %979 = vmatpush1.msra.mxu0 0.0
      %980 = vmatprep.subr.mxu0 0.0
      %981 = vmatpush1.msra.mxu0 0.0
      %982 = vmatprep.subr.mxu0 0.0
      %983 = vmatpush1.msra.mxu0 0.0
      %984 = vmatprep.subr.mxu0 0.0
      %985 = vmatpush1.msra.mxu0 0.0
      %986 = vmatprep.subr.mxu0 0.0
      %987 = vmatpush1.msra.mxu0 0.0
      %988 = vmatprep.subr.mxu0 0.0
      %989 = vmatpush1.msra.mxu0 0.0
      %990 = vmatprep.subr.mxu0 0.0
      %991 = vmatpush1.msra.mxu0 0.0
      %992 = vmatprep.subr.mxu0 0.0
      %993 = vmatpush1.msra.mxu0 0.0
      %994 = vmatprep.subr.mxu0 0.0
      %995 = vmatpush1.msra.mxu0 0.0
      %996 = vmatprep.subr.mxu0 0.0
      %997 = vmatpush1.msra.mxu0 0.0
      %998 = vmatprep.subr.mxu0 0.0
      %999 = vmatpush1.msra.mxu0 0.0
      %1000 = vmatprep.subr.mxu0 0.0
      %1001 = vmatpush1.msra.mxu0 0.0
      %1002 = vmatprep.subr.mxu0 %v968
      %1003 = vmatpush1.msra.mxu0 %v966
      %1004 = vmatprep.subr.mxu0 0.0
      %1005 = vmatpush2.msra.mxu0 0.0
      %1006 = vmatprep.subr.mxu0 0.0
      %1007 = vmatpush2.msra.mxu0 0.0
      %1008 = vmatprep.subr.mxu0 0.0
      %1009 = vmatpush2.msra.mxu0 0.0
      %1010 = vmatprep.subr.mxu0 0.0
      %1011 = vmatpush2.msra.mxu0 0.0
      %1012 = vmatprep.subr.mxu0 0.0
      %1013 = vmatpush2.msra.mxu0 0.0
      %1014 = vmatprep.subr.mxu0 0.0
      %1015 = vmatpush2.msra.mxu0 0.0
      %1016 = vmatprep.subr.mxu0 0.0
      %1017 = vmatpush2.msra.mxu0 0.0
      %1018 = vmatprep.subr.mxu0 0.0
      %1019 = vmatpush2.msra.mxu0 0.0
      %1020 = vmatprep.subr.mxu0 0.0
      %1021 = vmatpush2.msra.mxu0 0.0
      %1022 = vmatprep.subr.mxu0 0.0
      %1023 = vmatpush2.msra.mxu0 0.0
      %1024 = vmatprep.subr.mxu0 0.0
      %1025 = vmatpush2.msra.mxu0 0.0
      %1026 = vmatprep.subr.mxu0 0.0
      %1027 = vmatpush2.msra.mxu0 0.0
      %1028 = vmatprep.subr.mxu0 0.0
      %1029 = vmatpush2.msra.mxu0 0.0
      %1030 = vmatprep.subr.mxu0 0.0
      %1031 = vmatpush2.msra.mxu0 0.0
      %1032 = vmatprep.subr.mxu0 0.0
      %1033 = vmatpush2.msra.mxu0 0.0
      %1034 = vmatprep.subr.mxu0 0.0
      %1035 = vmatpush2.msra.mxu0 0.0
      %1036 = vmatprep.mubr.f32.mxu0 0.0
      %1037 = vmatmul.mubr.f32.gmra.mxu0 %v964
      %v1038 = vpop.f32.mrf.mxu0
      %v1039 = vadd.f32 0.0, %v1038
      %v1040 = vpop.f32.mrf.mxu0
      %v1041 = vadd.f32 0.0, %v1040
      %1042 = vdwg.mxu0
      %1043 = vmatprep.subr.mxu0 0.0
      %1044 = vmatpush1.msra.mxu0 0.0
      %1045 = vmatprep.subr.mxu0 0.0
      %1046 = vmatpush1.msra.mxu0 0.0
      %1047 = vmatprep.subr.mxu0 0.0
      %1048 = vmatpush1.msra.mxu0 0.0
      %1049 = vmatprep.subr.mxu0 0.0
      %1050 = vmatpush1.msra.mxu0 0.0
      %1051 = vmatprep.subr.mxu0 0.0
      %1052 = vmatpush1.msra.mxu0 0.0
      %1053 = vmatprep.subr.mxu0 0.0
      %1054 = vmatpush1.msra.mxu0 0.0
      %1055 = vmatprep.subr.mxu0 0.0
      %1056 = vmatpush1.msra.mxu0 0.0
      %1057 = vmatprep.subr.mxu0 0.0
      %1058 = vmatpush1.msra.mxu0 0.0
      %1059 = vmatprep.subr.mxu0 0.0
      %1060 = vmatpush1.msra.mxu0 0.0
      %1061 = vmatprep.subr.mxu0 0.0
      %1062 = vmatpush1.msra.mxu0 0.0
      %1063 = vmatprep.subr.mxu0 0.0
      %1064 = vmatpush1.msra.mxu0 0.0
      %1065 = vmatprep.subr.mxu0 0.0
      %1066 = vmatpush1.msra.mxu0 0.0
      %1067 = vmatprep.subr.mxu0 0.0
      %1068 = vmatpush1.msra.mxu0 0.0
      %1069 = vmatprep.subr.mxu0 0.0
      %1070 = vmatpush1.msra.mxu0 0.0
      %1071 = vmatprep.subr.mxu0 0.0
      %1072 = vmatpush1.msra.mxu0 0.0
      %1073 = vmatprep.subr.mxu0 0.0
      %1074 = vmatpush1.msra.mxu0 %v970
      %1075 = vmatprep.subr.mxu0 0.0
      %1076 = vmatpush2.msra.mxu0 0.0
      %1077 = vmatprep.subr.mxu0 0.0
      %1078 = vmatpush2.msra.mxu0 0.0
      %1079 = vmatprep.subr.mxu0 0.0
      %1080 = vmatpush2.msra.mxu0 0.0
      %1081 = vmatprep.subr.mxu0 0.0
      %1082 = vmatpush2.msra.mxu0 0.0
      %1083 = vmatprep.subr.mxu0 0.0
      %1084 = vmatpush2.msra.mxu0 0.0
      %1085 = vmatprep.subr.mxu0 0.0
      %1086 = vmatpush2.msra.mxu0 0.0
      %1087 = vmatprep.subr.mxu0 0.0
      %1088 = vmatpush2.msra.mxu0 0.0
      %1089 = vmatprep.subr.mxu0 0.0
      %1090 = vmatpush2.msra.mxu0 0.0
      %1091 = vmatprep.subr.mxu0 0.0
      %1092 = vmatpush2.msra.mxu0 0.0
      %1093 = vmatprep.subr.mxu0 0.0
      %1094 = vmatpush2.msra.mxu0 0.0
      %1095 = vmatprep.subr.mxu0 0.0
      %1096 = vmatpush2.msra.mxu0 0.0
      %1097 = vmatprep.subr.mxu0 0.0
      %1098 = vmatpush2.msra.mxu0 0.0
      %1099 = vmatprep.subr.mxu0 0.0
      %1100 = vmatpush2.msra.mxu0 0.0
      %1101 = vmatprep.subr.mxu0 0.0
      %1102 = vmatpush2.msra.mxu0 0.0
      %1103 = vmatprep.subr.mxu0 0.0
      %1104 = vmatpush2.msra.mxu0 0.0
      %1105 = vmatprep.subr.mxu0 0.0
      %1106 = vmatpush2.msra.mxu0 0.0
      %1107 = vmatprep.mubr.f32.mxu0 0.0
      %1108 = vmatmul.mubr.f32.gmra.mxu0 %v964
      %v1109 = vpop.f32.mrf.mxu0
      %v1110 = vadd.f32 0.0, %v1109
      %v1111 = vpop.f32.mrf.mxu0
      %1112 = vdwg.mxu0
      %v1113 = vadd.f32 %v946, %v1039
      %v1114 = vadd.f32 %v947, %v1041
      %v1115 = vadd.f32 %v948, %v1110
      %s1116 = scalar_lea.vmem %s2, 40
      %v1117 = vld [vmem:[%s1116] sm:$0xff]
      %1118 = vrot.lane.b32.xlu0 %v282, 108
      %v1119 = vpop.permute.xlu0 %1118
      %1120 = vrot.lane.b32.xlu0 %v287, 108
      %v1121 = vpop.permute.xlu0 %1120
      %1122 = vrot.lane.b32.xlu0 %v283, 108
      %v1123 = vpop.permute.xlu0 %1122
      %1124 = vrot.lane.b32.xlu0 %v284, 108
      %v1125 = vpop.permute.xlu0 %1124
      %vm1126 = vcmask 883712
      %v1127 = vsel %vm1126, %v1119, %v1121
      %v1128 = vsel %vm1126, %v1121, %v1123
      %v1129 = vsel %vm1126, %v1123, %v1125
      %v1131 = vsel %vm295, %v1117, 0
      %v1133 = vsel %vm299, %v1127, 0
      %v1135 = vsel %vm299, %v1128, 0
      %v1137 = vsel %vm299, %v1129, 0
      %1139 = vmatprep.subr.mxu0 0.0
      %1140 = vmatpush1.msra.mxu0 0.0
      %1141 = vmatprep.subr.mxu0 0.0
      %1142 = vmatpush1.msra.mxu0 0.0
      %1143 = vmatprep.subr.mxu0 0.0
      %1144 = vmatpush1.msra.mxu0 0.0
      %1145 = vmatprep.subr.mxu0 0.0
      %1146 = vmatpush1.msra.mxu0 0.0
      %1147 = vmatprep.subr.mxu0 0.0
      %1148 = vmatpush1.msra.mxu0 0.0
      %1149 = vmatprep.subr.mxu0 0.0
      %1150 = vmatpush1.msra.mxu0 0.0
      %1151 = vmatprep.subr.mxu0 0.0
      %1152 = vmatpush1.msra.mxu0 0.0
      %1153 = vmatprep.subr.mxu0 0.0
      %1154 = vmatpush1.msra.mxu0 0.0
      %1155 = vmatprep.subr.mxu0 0.0
      %1156 = vmatpush1.msra.mxu0 0.0
      %1157 = vmatprep.subr.mxu0 0.0
      %1158 = vmatpush1.msra.mxu0 0.0
      %1159 = vmatprep.subr.mxu0 0.0
      %1160 = vmatpush1.msra.mxu0 0.0
      %1161 = vmatprep.subr.mxu0 0.0
      %1162 = vmatpush1.msra.mxu0 0.0
      %1163 = vmatprep.subr.mxu0 0.0
      %1164 = vmatpush1.msra.mxu0 0.0
      %1165 = vmatprep.subr.mxu0 0.0
      %1166 = vmatpush1.msra.mxu0 0.0
      %1167 = vmatprep.subr.mxu0 0.0
      %1168 = vmatpush1.msra.mxu0 0.0
      %1169 = vmatprep.subr.mxu0 %v1135
      %1170 = vmatpush1.msra.mxu0 %v1133
      %1171 = vmatprep.subr.mxu0 0.0
      %1172 = vmatpush2.msra.mxu0 0.0
      %1173 = vmatprep.subr.mxu0 0.0
      %1174 = vmatpush2.msra.mxu0 0.0
      %1175 = vmatprep.subr.mxu0 0.0
      %1176 = vmatpush2.msra.mxu0 0.0
      %1177 = vmatprep.subr.mxu0 0.0
      %1178 = vmatpush2.msra.mxu0 0.0
      %1179 = vmatprep.subr.mxu0 0.0
      %1180 = vmatpush2.msra.mxu0 0.0
      %1181 = vmatprep.subr.mxu0 0.0
      %1182 = vmatpush2.msra.mxu0 0.0
      %1183 = vmatprep.subr.mxu0 0.0
      %1184 = vmatpush2.msra.mxu0 0.0
      %1185 = vmatprep.subr.mxu0 0.0
      %1186 = vmatpush2.msra.mxu0 0.0
      %1187 = vmatprep.subr.mxu0 0.0
      %1188 = vmatpush2.msra.mxu0 0.0
      %1189 = vmatprep.subr.mxu0 0.0
      %1190 = vmatpush2.msra.mxu0 0.0
      %1191 = vmatprep.subr.mxu0 0.0
      %1192 = vmatpush2.msra.mxu0 0.0
      %1193 = vmatprep.subr.mxu0 0.0
      %1194 = vmatpush2.msra.mxu0 0.0
      %1195 = vmatprep.subr.mxu0 0.0
      %1196 = vmatpush2.msra.mxu0 0.0
      %1197 = vmatprep.subr.mxu0 0.0
      %1198 = vmatpush2.msra.mxu0 0.0
      %1199 = vmatprep.subr.mxu0 0.0
      %1200 = vmatpush2.msra.mxu0 0.0
      %1201 = vmatprep.subr.mxu0 0.0
      %1202 = vmatpush2.msra.mxu0 0.0
      %1203 = vmatprep.mubr.f32.mxu0 0.0
      %1204 = vmatmul.mubr.f32.gmra.mxu0 %v1131
      %v1205 = vpop.f32.mrf.mxu0
      %v1206 = vadd.f32 0.0, %v1205
      %v1207 = vpop.f32.mrf.mxu0
      %v1208 = vadd.f32 0.0, %v1207
      %1209 = vdwg.mxu0
      %1210 = vmatprep.subr.mxu0 0.0
      %1211 = vmatpush1.msra.mxu0 0.0
      %1212 = vmatprep.subr.mxu0 0.0
      %1213 = vmatpush1.msra.mxu0 0.0
      %1214 = vmatprep.subr.mxu0 0.0
      %1215 = vmatpush1.msra.mxu0 0.0
      %1216 = vmatprep.subr.mxu0 0.0
      %1217 = vmatpush1.msra.mxu0 0.0
      %1218 = vmatprep.subr.mxu0 0.0
      %1219 = vmatpush1.msra.mxu0 0.0
      %1220 = vmatprep.subr.mxu0 0.0
      %1221 = vmatpush1.msra.mxu0 0.0
      %1222 = vmatprep.subr.mxu0 0.0
      %1223 = vmatpush1.msra.mxu0 0.0
      %1224 = vmatprep.subr.mxu0 0.0
      %1225 = vmatpush1.msra.mxu0 0.0
      %1226 = vmatprep.subr.mxu0 0.0
      %1227 = vmatpush1.msra.mxu0 0.0
      %1228 = vmatprep.subr.mxu0 0.0
      %1229 = vmatpush1.msra.mxu0 0.0
      %1230 = vmatprep.subr.mxu0 0.0
      %1231 = vmatpush1.msra.mxu0 0.0
      %1232 = vmatprep.subr.mxu0 0.0
      %1233 = vmatpush1.msra.mxu0 0.0
      %1234 = vmatprep.subr.mxu0 0.0
      %1235 = vmatpush1.msra.mxu0 0.0
      %1236 = vmatprep.subr.mxu0 0.0
      %1237 = vmatpush1.msra.mxu0 0.0
      %1238 = vmatprep.subr.mxu0 0.0
      %1239 = vmatpush1.msra.mxu0 0.0
      %1240 = vmatprep.subr.mxu0 0.0
      %1241 = vmatpush1.msra.mxu0 %v1137
      %1242 = vmatprep.subr.mxu0 0.0
      %1243 = vmatpush2.msra.mxu0 0.0
      %1244 = vmatprep.subr.mxu0 0.0
      %1245 = vmatpush2.msra.mxu0 0.0
      %1246 = vmatprep.subr.mxu0 0.0
      %1247 = vmatpush2.msra.mxu0 0.0
      %1248 = vmatprep.subr.mxu0 0.0
      %1249 = vmatpush2.msra.mxu0 0.0
      %1250 = vmatprep.subr.mxu0 0.0
      %1251 = vmatpush2.msra.mxu0 0.0
      %1252 = vmatprep.subr.mxu0 0.0
      %1253 = vmatpush2.msra.mxu0 0.0
      %1254 = vmatprep.subr.mxu0 0.0
      %1255 = vmatpush2.msra.mxu0 0.0
      %1256 = vmatprep.subr.mxu0 0.0
      %1257 = vmatpush2.msra.mxu0 0.0
      %1258 = vmatprep.subr.mxu0 0.0
      %1259 = vmatpush2.msra.mxu0 0.0
      %1260 = vmatprep.subr.mxu0 0.0
      %1261 = vmatpush2.msra.mxu0 0.0
      %1262 = vmatprep.subr.mxu0 0.0
      %1263 = vmatpush2.msra.mxu0 0.0
      %1264 = vmatprep.subr.mxu0 0.0
      %1265 = vmatpush2.msra.mxu0 0.0
      %1266 = vmatprep.subr.mxu0 0.0
      %1267 = vmatpush2.msra.mxu0 0.0
      %1268 = vmatprep.subr.mxu0 0.0
      %1269 = vmatpush2.msra.mxu0 0.0
      %1270 = vmatprep.subr.mxu0 0.0
      %1271 = vmatpush2.msra.mxu0 0.0
      %1272 = vmatprep.subr.mxu0 0.0
      %1273 = vmatpush2.msra.mxu0 0.0
      %1274 = vmatprep.mubr.f32.mxu0 0.0
      %1275 = vmatmul.mubr.f32.gmra.mxu0 %v1131
      %v1276 = vpop.f32.mrf.mxu0
      %v1277 = vadd.f32 0.0, %v1276
      %v1278 = vpop.f32.mrf.mxu0
      %1279 = vdwg.mxu0
      %v1280 = vadd.f32 %v1113, %v1206
      %v1281 = vadd.f32 %v1114, %v1208
      %v1282 = vadd.f32 %v1115, %v1277
      %s1283 = scalar_lea.vmem %s2, 48
      %v1284 = vld [vmem:[%s1283] sm:$0xff]
      %1285 = vrot.lane.b32.xlu0 %v282, 92
      %v1286 = vpop.permute.xlu0 %1285
      %1287 = vrot.lane.b32.xlu0 %v287, 92
      %v1288 = vpop.permute.xlu0 %1287
      %1289 = vrot.lane.b32.xlu0 %v283, 92
      %v1290 = vpop.permute.xlu0 %1289
      %1291 = vrot.lane.b32.xlu0 %v284, 92
      %v1292 = vpop.permute.xlu0 %1291
      %vm1293 = vcmask 752640
      %v1294 = vsel %vm1293, %v1286, %v1288
      %v1295 = vsel %vm1293, %v1288, %v1290
      %v1296 = vsel %vm1293, %v1290, %v1292
      %v1298 = vsel %vm295, %v1284, 0
      %v1300 = vsel %vm299, %v1294, 0
      %v1302 = vsel %vm299, %v1295, 0
      %v1304 = vsel %vm299, %v1296, 0
      %1306 = vmatprep.subr.mxu0 0.0
      %1307 = vmatpush1.msra.mxu0 0.0
      %1308 = vmatprep.subr.mxu0 0.0
      %1309 = vmatpush1.msra.mxu0 0.0
      %1310 = vmatprep.subr.mxu0 0.0
      %1311 = vmatpush1.msra.mxu0 0.0
      %1312 = vmatprep.subr.mxu0 0.0
      %1313 = vmatpush1.msra.mxu0 0.0
      %1314 = vmatprep.subr.mxu0 0.0
      %1315 = vmatpush1.msra.mxu0 0.0
      %1316 = vmatprep.subr.mxu0 0.0
      %1317 = vmatpush1.msra.mxu0 0.0
      %1318 = vmatprep.subr.mxu0 0.0
      %1319 = vmatpush1.msra.mxu0 0.0
      %1320 = vmatprep.subr.mxu0 0.0
      %1321 = vmatpush1.msra.mxu0 0.0
      %1322 = vmatprep.subr.mxu0 0.0
      %1323 = vmatpush1.msra.mxu0 0.0
      %1324 = vmatprep.subr.mxu0 0.0
      %1325 = vmatpush1.msra.mxu0 0.0
      %1326 = vmatprep.subr.mxu0 0.0
      %1327 = vmatpush1.msra.mxu0 0.0
      %1328 = vmatprep.subr.mxu0 0.0
      %1329 = vmatpush1.msra.mxu0 0.0
      %1330 = vmatprep.subr.mxu0 0.0
      %1331 = vmatpush1.msra.mxu0 0.0
      %1332 = vmatprep.subr.mxu0 0.0
      %1333 = vmatpush1.msra.mxu0 0.0
      %1334 = vmatprep.subr.mxu0 0.0
      %1335 = vmatpush1.msra.mxu0 0.0
      %1336 = vmatprep.subr.mxu0 %v1302
      %1337 = vmatpush1.msra.mxu0 %v1300
      %1338 = vmatprep.subr.mxu0 0.0
      %1339 = vmatpush2.msra.mxu0 0.0
      %1340 = vmatprep.subr.mxu0 0.0
      %1341 = vmatpush2.msra.mxu0 0.0
      %1342 = vmatprep.subr.mxu0 0.0
      %1343 = vmatpush2.msra.mxu0 0.0
      %1344 = vmatprep.subr.mxu0 0.0
      %1345 = vmatpush2.msra.mxu0 0.0
      %1346 = vmatprep.subr.mxu0 0.0
      %1347 = vmatpush2.msra.mxu0 0.0
      %1348 = vmatprep.subr.mxu0 0.0
      %1349 = vmatpush2.msra.mxu0 0.0
      %1350 = vmatprep.subr.mxu0 0.0
      %1351 = vmatpush2.msra.mxu0 0.0
      %1352 = vmatprep.subr.mxu0 0.0
      %1353 = vmatpush2.msra.mxu0 0.0
      %1354 = vmatprep.subr.mxu0 0.0
      %1355 = vmatpush2.msra.mxu0 0.0
      %1356 = vmatprep.subr.mxu0 0.0
      %1357 = vmatpush2.msra.mxu0 0.0
      %1358 = vmatprep.subr.mxu0 0.0
      %1359 = vmatpush2.msra.mxu0 0.0
      %1360 = vmatprep.subr.mxu0 0.0
      %1361 = vmatpush2.msra.mxu0 0.0
      %1362 = vmatprep.subr.mxu0 0.0
      %1363 = vmatpush2.msra.mxu0 0.0
      %1364 = vmatprep.subr.mxu0 0.0
      %1365 = vmatpush2.msra.mxu0 0.0
      %1366 = vmatprep.subr.mxu0 0.0
      %1367 = vmatpush2.msra.mxu0 0.0
      %1368 = vmatprep.subr.mxu0 0.0
      %1369 = vmatpush2.msra.mxu0 0.0
      %1370 = vmatprep.mubr.f32.mxu0 0.0
      %1371 = vmatmul.mubr.f32.gmra.mxu0 %v1298
      %v1372 = vpop.f32.mrf.mxu0
      %v1373 = vadd.f32 0.0, %v1372
      %v1374 = vpop.f32.mrf.mxu0
      %v1375 = vadd.f32 0.0, %v1374
      %1376 = vdwg.mxu0
      %1377 = vmatprep.subr.mxu0 0.0
      %1378 = vmatpush1.msra.mxu0 0.0
      %1379 = vmatprep.subr.mxu0 0.0
      %1380 = vmatpush1.msra.mxu0 0.0
      %1381 = vmatprep.subr.mxu0 0.0
      %1382 = vmatpush1.msra.mxu0 0.0
      %1383 = vmatprep.subr.mxu0 0.0
      %1384 = vmatpush1.msra.mxu0 0.0
      %1385 = vmatprep.subr.mxu0 0.0
      %1386 = vmatpush1.msra.mxu0 0.0
      %1387 = vmatprep.subr.mxu0 0.0
      %1388 = vmatpush1.msra.mxu0 0.0
      %1389 = vmatprep.subr.mxu0 0.0
      %1390 = vmatpush1.msra.mxu0 0.0
      %1391 = vmatprep.subr.mxu0 0.0
      %1392 = vmatpush1.msra.mxu0 0.0
      %1393 = vmatprep.subr.mxu0 0.0
      %1394 = vmatpush1.msra.mxu0 0.0
      %1395 = vmatprep.subr.mxu0 0.0
      %1396 = vmatpush1.msra.mxu0 0.0
      %1397 = vmatprep.subr.mxu0 0.0
      %1398 = vmatpush1.msra.mxu0 0.0
      %1399 = vmatprep.subr.mxu0 0.0
      %1400 = vmatpush1.msra.mxu0 0.0
      %1401 = vmatprep.subr.mxu0 0.0
      %1402 = vmatpush1.msra.mxu0 0.0
      %1403 = vmatprep.subr.mxu0 0.0
      %1404 = vmatpush1.msra.mxu0 0.0
      %1405 = vmatprep.subr.mxu0 0.0
      %1406 = vmatpush1.msra.mxu0 0.0
      %1407 = vmatprep.subr.mxu0 0.0
      %1408 = vmatpush1.msra.mxu0 %v1304
      %1409 = vmatprep.subr.mxu0 0.0
      %1410 = vmatpush2.msra.mxu0 0.0
      %1411 = vmatprep.subr.mxu0 0.0
      %1412 = vmatpush2.msra.mxu0 0.0
      %1413 = vmatprep.subr.mxu0 0.0
      %1414 = vmatpush2.msra.mxu0 0.0
      %1415 = vmatprep.subr.mxu0 0.0
      %1416 = vmatpush2.msra.mxu0 0.0
      %1417 = vmatprep.subr.mxu0 0.0
      %1418 = vmatpush2.msra.mxu0 0.0
      %1419 = vmatprep.subr.mxu0 0.0
      %1420 = vmatpush2.msra.mxu0 0.0
      %1421 = vmatprep.subr.mxu0 0.0
      %1422 = vmatpush2.msra.mxu0 0.0
      %1423 = vmatprep.subr.mxu0 0.0
      %1424 = vmatpush2.msra.mxu0 0.0
      %1425 = vmatprep.subr.mxu0 0.0
      %1426 = vmatpush2.msra.mxu0 0.0
      %1427 = vmatprep.subr.mxu0 0.0
      %1428 = vmatpush2.msra.mxu0 0.0
      %1429 = vmatprep.subr.mxu0 0.0
      %1430 = vmatpush2.msra.mxu0 0.0
      %1431 = vmatprep.subr.mxu0 0.0
      %1432 = vmatpush2.msra.mxu0 0.0
      %1433 = vmatprep.subr.mxu0 0.0
      %1434 = vmatpush2.msra.mxu0 0.0
      %1435 = vmatprep.subr.mxu0 0.0
      %1436 = vmatpush2.msra.mxu0 0.0
      %1437 = vmatprep.subr.mxu0 0.0
      %1438 = vmatpush2.msra.mxu0 0.0
      %1439 = vmatprep.subr.mxu0 0.0
      %1440 = vmatpush2.msra.mxu0 0.0
      %1441 = vmatprep.mubr.f32.mxu0 0.0
      %1442 = vmatmul.mubr.f32.gmra.mxu0 %v1298
      %v1443 = vpop.f32.mrf.mxu0
      %v1444 = vadd.f32 0.0, %v1443
      %v1445 = vpop.f32.mrf.mxu0
      %1446 = vdwg.mxu0
      %v1447 = vadd.f32 %v1280, %v1373
      %v1448 = vadd.f32 %v1281, %v1375
      %v1449 = vadd.f32 %v1282, %v1444
      %s1450 = scalar_lea.vmem %s2, 56
      %v1451 = vld [vmem:[%s1450] sm:$0xff]
      %1452 = vrot.lane.b32.xlu0 %v282, 91
      %v1453 = vpop.permute.xlu0 %1452
      %1454 = vrot.lane.b32.xlu0 %v287, 91
      %v1455 = vpop.permute.xlu0 %1454
      %1456 = vrot.lane.b32.xlu0 %v283, 91
      %v1457 = vpop.permute.xlu0 %1456
      %1458 = vrot.lane.b32.xlu0 %v284, 91
      %v1459 = vpop.permute.xlu0 %1458
      %vm1460 = vcmask 744448
      %v1461 = vsel %vm1460, %v1453, %v1455
      %v1462 = vsel %vm1460, %v1455, %v1457
      %v1463 = vsel %vm1460, %v1457, %v1459
      %v1465 = vsel %vm295, %v1451, 0
      %v1467 = vsel %vm299, %v1461, 0
      %v1469 = vsel %vm299, %v1462, 0
      %v1471 = vsel %vm299, %v1463, 0
      %1473 = vmatprep.subr.mxu0 0.0
      %1474 = vmatpush1.msra.mxu0 0.0
      %1475 = vmatprep.subr.mxu0 0.0
      %1476 = vmatpush1.msra.mxu0 0.0
      %1477 = vmatprep.subr.mxu0 0.0
      %1478 = vmatpush1.msra.mxu0 0.0
      %1479 = vmatprep.subr.mxu0 0.0
      %1480 = vmatpush1.msra.mxu0 0.0
      %1481 = vmatprep.subr.mxu0 0.0
      %1482 = vmatpush1.msra.mxu0 0.0
      %1483 = vmatprep.subr.mxu0 0.0
      %1484 = vmatpush1.msra.mxu0 0.0
      %1485 = vmatprep.subr.mxu0 0.0
      %1486 = vmatpush1.msra.mxu0 0.0
      %1487 = vmatprep.subr.mxu0 0.0
      %1488 = vmatpush1.msra.mxu0 0.0
      %1489 = vmatprep.subr.mxu0 0.0
      %1490 = vmatpush1.msra.mxu0 0.0
      %1491 = vmatprep.subr.mxu0 0.0
      %1492 = vmatpush1.msra.mxu0 0.0
      %1493 = vmatprep.subr.mxu0 0.0
      %1494 = vmatpush1.msra.mxu0 0.0
      %1495 = vmatprep.subr.mxu0 0.0
      %1496 = vmatpush1.msra.mxu0 0.0
      %1497 = vmatprep.subr.mxu0 0.0
      %1498 = vmatpush1.msra.mxu0 0.0
      %1499 = vmatprep.subr.mxu0 0.0
      %1500 = vmatpush1.msra.mxu0 0.0
      %1501 = vmatprep.subr.mxu0 0.0
      %1502 = vmatpush1.msra.mxu0 0.0
      %1503 = vmatprep.subr.mxu0 %v1469
      %1504 = vmatpush1.msra.mxu0 %v1467
      %1505 = vmatprep.subr.mxu0 0.0
      %1506 = vmatpush2.msra.mxu0 0.0
      %1507 = vmatprep.subr.mxu0 0.0
      %1508 = vmatpush2.msra.mxu0 0.0
      %1509 = vmatprep.subr.mxu0 0.0
      %1510 = vmatpush2.msra.mxu0 0.0
      %1511 = vmatprep.subr.mxu0 0.0
      %1512 = vmatpush2.msra.mxu0 0.0
      %1513 = vmatprep.subr.mxu0 0.0
      %1514 = vmatpush2.msra.mxu0 0.0
      %1515 = vmatprep.subr.mxu0 0.0
      %1516 = vmatpush2.msra.mxu0 0.0
      %1517 = vmatprep.subr.mxu0 0.0
      %1518 = vmatpush2.msra.mxu0 0.0
      %1519 = vmatprep.subr.mxu0 0.0
      %1520 = vmatpush2.msra.mxu0 0.0
      %1521 = vmatprep.subr.mxu0 0.0
      %1522 = vmatpush2.msra.mxu0 0.0
      %1523 = vmatprep.subr.mxu0 0.0
      %1524 = vmatpush2.msra.mxu0 0.0
      %1525 = vmatprep.subr.mxu0 0.0
      %1526 = vmatpush2.msra.mxu0 0.0
      %1527 = vmatprep.subr.mxu0 0.0
      %1528 = vmatpush2.msra.mxu0 0.0
      %1529 = vmatprep.subr.mxu0 0.0
      %1530 = vmatpush2.msra.mxu0 0.0
      %1531 = vmatprep.subr.mxu0 0.0
      %1532 = vmatpush2.msra.mxu0 0.0
      %1533 = vmatprep.subr.mxu0 0.0
      %1534 = vmatpush2.msra.mxu0 0.0
      %1535 = vmatprep.subr.mxu0 0.0
      %1536 = vmatpush2.msra.mxu0 0.0
      %1537 = vmatprep.mubr.f32.mxu0 0.0
      %1538 = vmatmul.mubr.f32.gmra.mxu0 %v1465
      %v1539 = vpop.f32.mrf.mxu0
      %v1540 = vadd.f32 0.0, %v1539
      %v1541 = vpop.f32.mrf.mxu0
      %v1542 = vadd.f32 0.0, %v1541
      %1543 = vdwg.mxu0
      %1544 = vmatprep.subr.mxu0 0.0
      %1545 = vmatpush1.msra.mxu0 0.0
      %1546 = vmatprep.subr.mxu0 0.0
      %1547 = vmatpush1.msra.mxu0 0.0
      %1548 = vmatprep.subr.mxu0 0.0
      %1549 = vmatpush1.msra.mxu0 0.0
      %1550 = vmatprep.subr.mxu0 0.0
      %1551 = vmatpush1.msra.mxu0 0.0
      %1552 = vmatprep.subr.mxu0 0.0
      %1553 = vmatpush1.msra.mxu0 0.0
      %1554 = vmatprep.subr.mxu0 0.0
      %1555 = vmatpush1.msra.mxu0 0.0
      %1556 = vmatprep.subr.mxu0 0.0
      %1557 = vmatpush1.msra.mxu0 0.0
      %1558 = vmatprep.subr.mxu0 0.0
      %1559 = vmatpush1.msra.mxu0 0.0
      %1560 = vmatprep.subr.mxu0 0.0
      %1561 = vmatpush1.msra.mxu0 0.0
      %1562 = vmatprep.subr.mxu0 0.0
      %1563 = vmatpush1.msra.mxu0 0.0
      %1564 = vmatprep.subr.mxu0 0.0
      %1565 = vmatpush1.msra.mxu0 0.0
      %1566 = vmatprep.subr.mxu0 0.0
      %1567 = vmatpush1.msra.mxu0 0.0
      %1568 = vmatprep.subr.mxu0 0.0
      %1569 = vmatpush1.msra.mxu0 0.0
      %1570 = vmatprep.subr.mxu0 0.0
      %1571 = vmatpush1.msra.mxu0 0.0
      %1572 = vmatprep.subr.mxu0 0.0
      %1573 = vmatpush1.msra.mxu0 0.0
      %1574 = vmatprep.subr.mxu0 0.0
      %1575 = vmatpush1.msra.mxu0 %v1471
      %1576 = vmatprep.subr.mxu0 0.0
      %1577 = vmatpush2.msra.mxu0 0.0
      %1578 = vmatprep.subr.mxu0 0.0
      %1579 = vmatpush2.msra.mxu0 0.0
      %1580 = vmatprep.subr.mxu0 0.0
      %1581 = vmatpush2.msra.mxu0 0.0
      %1582 = vmatprep.subr.mxu0 0.0
      %1583 = vmatpush2.msra.mxu0 0.0
      %1584 = vmatprep.subr.mxu0 0.0
      %1585 = vmatpush2.msra.mxu0 0.0
      %1586 = vmatprep.subr.mxu0 0.0
      %1587 = vmatpush2.msra.mxu0 0.0
      %1588 = vmatprep.subr.mxu0 0.0
      %1589 = vmatpush2.msra.mxu0 0.0
      %1590 = vmatprep.subr.mxu0 0.0
      %1591 = vmatpush2.msra.mxu0 0.0
      %1592 = vmatprep.subr.mxu0 0.0
      %1593 = vmatpush2.msra.mxu0 0.0
      %1594 = vmatprep.subr.mxu0 0.0
      %1595 = vmatpush2.msra.mxu0 0.0
      %1596 = vmatprep.subr.mxu0 0.0
      %1597 = vmatpush2.msra.mxu0 0.0
      %1598 = vmatprep.subr.mxu0 0.0
      %1599 = vmatpush2.msra.mxu0 0.0
      %1600 = vmatprep.subr.mxu0 0.0
      %1601 = vmatpush2.msra.mxu0 0.0
      %1602 = vmatprep.subr.mxu0 0.0
      %1603 = vmatpush2.msra.mxu0 0.0
      %1604 = vmatprep.subr.mxu0 0.0
      %1605 = vmatpush2.msra.mxu0 0.0
      %1606 = vmatprep.subr.mxu0 0.0
      %1607 = vmatpush2.msra.mxu0 0.0
      %1608 = vmatprep.mubr.f32.mxu0 0.0
      %1609 = vmatmul.mubr.f32.gmra.mxu0 %v1465
      %v1610 = vpop.f32.mrf.mxu0
      %v1611 = vadd.f32 0.0, %v1610
      %v1612 = vpop.f32.mrf.mxu0
      %1613 = vdwg.mxu0
      %v1614 = vadd.f32 %v1447, %v1540
      %v1615 = vadd.f32 %v1448, %v1542
      %v1616 = vadd.f32 %v1449, %v1611
      %s1617 = scalar_lea.vmem %s2, 64
      %v1618 = vld [vmem:[%s1617] sm:$0xff]
      %1619 = vrot.lane.b32.xlu0 %v282, 90
      %v1620 = vpop.permute.xlu0 %1619
      %1621 = vrot.lane.b32.xlu0 %v287, 90
      %v1622 = vpop.permute.xlu0 %1621
      %1623 = vrot.lane.b32.xlu0 %v283, 90
      %v1624 = vpop.permute.xlu0 %1623
      %1625 = vrot.lane.b32.xlu0 %v284, 90
      %v1626 = vpop.permute.xlu0 %1625
      %vm1627 = vcmask 736256
      %v1628 = vsel %vm1627, %v1620, %v1622
      %v1629 = vsel %vm1627, %v1622, %v1624
      %v1630 = vsel %vm1627, %v1624, %v1626
      %v1632 = vsel %vm295, %v1618, 0
      %v1634 = vsel %vm299, %v1628, 0
      %v1636 = vsel %vm299, %v1629, 0
      %v1638 = vsel %vm299, %v1630, 0
      %1640 = vmatprep.subr.mxu0 0.0
      %1641 = vmatpush1.msra.mxu0 0.0
      %1642 = vmatprep.subr.mxu0 0.0
      %1643 = vmatpush1.msra.mxu0 0.0
      %1644 = vmatprep.subr.mxu0 0.0
      %1645 = vmatpush1.msra.mxu0 0.0
      %1646 = vmatprep.subr.mxu0 0.0
      %1647 = vmatpush1.msra.mxu0 0.0
      %1648 = vmatprep.subr.mxu0 0.0
      %1649 = vmatpush1.msra.mxu0 0.0
      %1650 = vmatprep.subr.mxu0 0.0
      %1651 = vmatpush1.msra.mxu0 0.0
      %1652 = vmatprep.subr.mxu0 0.0
      %1653 = vmatpush1.msra.mxu0 0.0
      %1654 = vmatprep.subr.mxu0 0.0
      %1655 = vmatpush1.msra.mxu0 0.0
      %1656 = vmatprep.subr.mxu0 0.0
      %1657 = vmatpush1.msra.mxu0 0.0
      %1658 = vmatprep.subr.mxu0 0.0
      %1659 = vmatpush1.msra.mxu0 0.0
      %1660 = vmatprep.subr.mxu0 0.0
      %1661 = vmatpush1.msra.mxu0 0.0
      %1662 = vmatprep.subr.mxu0 0.0
      %1663 = vmatpush1.msra.mxu0 0.0
      %1664 = vmatprep.subr.mxu0 0.0
      %1665 = vmatpush1.msra.mxu0 0.0
      %1666 = vmatprep.subr.mxu0 0.0
      %1667 = vmatpush1.msra.mxu0 0.0
      %1668 = vmatprep.subr.mxu0 0.0
      %1669 = vmatpush1.msra.mxu0 0.0
      %1670 = vmatprep.subr.mxu0 %v1636
      %1671 = vmatpush1.msra.mxu0 %v1634
      %1672 = vmatprep.subr.mxu0 0.0
      %1673 = vmatpush2.msra.mxu0 0.0
      %1674 = vmatprep.subr.mxu0 0.0
      %1675 = vmatpush2.msra.mxu0 0.0
      %1676 = vmatprep.subr.mxu0 0.0
      %1677 = vmatpush2.msra.mxu0 0.0
      %1678 = vmatprep.subr.mxu0 0.0
      %1679 = vmatpush2.msra.mxu0 0.0
      %1680 = vmatprep.subr.mxu0 0.0
      %1681 = vmatpush2.msra.mxu0 0.0
      %1682 = vmatprep.subr.mxu0 0.0
      %1683 = vmatpush2.msra.mxu0 0.0
      %1684 = vmatprep.subr.mxu0 0.0
      %1685 = vmatpush2.msra.mxu0 0.0
      %1686 = vmatprep.subr.mxu0 0.0
      %1687 = vmatpush2.msra.mxu0 0.0
      %1688 = vmatprep.subr.mxu0 0.0
      %1689 = vmatpush2.msra.mxu0 0.0
      %1690 = vmatprep.subr.mxu0 0.0
      %1691 = vmatpush2.msra.mxu0 0.0
      %1692 = vmatprep.subr.mxu0 0.0
      %1693 = vmatpush2.msra.mxu0 0.0
      %1694 = vmatprep.subr.mxu0 0.0
      %1695 = vmatpush2.msra.mxu0 0.0
      %1696 = vmatprep.subr.mxu0 0.0
      %1697 = vmatpush2.msra.mxu0 0.0
      %1698 = vmatprep.subr.mxu0 0.0
      %1699 = vmatpush2.msra.mxu0 0.0
      %1700 = vmatprep.subr.mxu0 0.0
      %1701 = vmatpush2.msra.mxu0 0.0
      %1702 = vmatprep.subr.mxu0 0.0
      %1703 = vmatpush2.msra.mxu0 0.0
      %1704 = vmatprep.mubr.f32.mxu0 0.0
      %1705 = vmatmul.mubr.f32.gmra.mxu0 %v1632
      %v1706 = vpop.f32.mrf.mxu0
      %v1707 = vadd.f32 0.0, %v1706
      %v1708 = vpop.f32.mrf.mxu0
      %v1709 = vadd.f32 0.0, %v1708
      %1710 = vdwg.mxu0
      %1711 = vmatprep.subr.mxu0 0.0
      %1712 = vmatpush1.msra.mxu0 0.0
      %1713 = vmatprep.subr.mxu0 0.0
      %1714 = vmatpush1.msra.mxu0 0.0
      %1715 = vmatprep.subr.mxu0 0.0
      %1716 = vmatpush1.msra.mxu0 0.0
      %1717 = vmatprep.subr.mxu0 0.0
      %1718 = vmatpush1.msra.mxu0 0.0
      %1719 = vmatprep.subr.mxu0 0.0
      %1720 = vmatpush1.msra.mxu0 0.0
      %1721 = vmatprep.subr.mxu0 0.0
      %1722 = vmatpush1.msra.mxu0 0.0
      %1723 = vmatprep.subr.mxu0 0.0
      %1724 = vmatpush1.msra.mxu0 0.0
      %1725 = vmatprep.subr.mxu0 0.0
      %1726 = vmatpush1.msra.mxu0 0.0
      %1727 = vmatprep.subr.mxu0 0.0
      %1728 = vmatpush1.msra.mxu0 0.0
      %1729 = vmatprep.subr.mxu0 0.0
      %1730 = vmatpush1.msra.mxu0 0.0
      %1731 = vmatprep.subr.mxu0 0.0
      %1732 = vmatpush1.msra.mxu0 0.0
      %1733 = vmatprep.subr.mxu0 0.0
      %1734 = vmatpush1.msra.mxu0 0.0
      %1735 = vmatprep.subr.mxu0 0.0
      %1736 = vmatpush1.msra.mxu0 0.0
      %1737 = vmatprep.subr.mxu0 0.0
      %1738 = vmatpush1.msra.mxu0 0.0
      %1739 = vmatprep.subr.mxu0 0.0
      %1740 = vmatpush1.msra.mxu0 0.0
      %1741 = vmatprep.subr.mxu0 0.0
      %1742 = vmatpush1.msra.mxu0 %v1638
      %1743 = vmatprep.subr.mxu0 0.0
      %1744 = vmatpush2.msra.mxu0 0.0
      %1745 = vmatprep.subr.mxu0 0.0
      %1746 = vmatpush2.msra.mxu0 0.0
      %1747 = vmatprep.subr.mxu0 0.0
      %1748 = vmatpush2.msra.mxu0 0.0
      %1749 = vmatprep.subr.mxu0 0.0
      %1750 = vmatpush2.msra.mxu0 0.0
      %1751 = vmatprep.subr.mxu0 0.0
      %1752 = vmatpush2.msra.mxu0 0.0
      %1753 = vmatprep.subr.mxu0 0.0
      %1754 = vmatpush2.msra.mxu0 0.0
      %1755 = vmatprep.subr.mxu0 0.0
      %1756 = vmatpush2.msra.mxu0 0.0
      %1757 = vmatprep.subr.mxu0 0.0
      %1758 = vmatpush2.msra.mxu0 0.0
      %1759 = vmatprep.subr.mxu0 0.0
      %1760 = vmatpush2.msra.mxu0 0.0
      %1761 = vmatprep.subr.mxu0 0.0
      %1762 = vmatpush2.msra.mxu0 0.0
      %1763 = vmatprep.subr.mxu0 0.0
      %1764 = vmatpush2.msra.mxu0 0.0
      %1765 = vmatprep.subr.mxu0 0.0
      %1766 = vmatpush2.msra.mxu0 0.0
      %1767 = vmatprep.subr.mxu0 0.0
      %1768 = vmatpush2.msra.mxu0 0.0
      %1769 = vmatprep.subr.mxu0 0.0
      %1770 = vmatpush2.msra.mxu0 0.0
      %1771 = vmatprep.subr.mxu0 0.0
      %1772 = vmatpush2.msra.mxu0 0.0
      %1773 = vmatprep.subr.mxu0 0.0
      %1774 = vmatpush2.msra.mxu0 0.0
      %1775 = vmatprep.mubr.f32.mxu0 0.0
      %1776 = vmatmul.mubr.f32.gmra.mxu0 %v1632
      %v1777 = vpop.f32.mrf.mxu0
      %v1778 = vadd.f32 0.0, %v1777
      %v1779 = vpop.f32.mrf.mxu0
      %1780 = vdwg.mxu0
      %v1781 = vadd.f32 %v1614, %v1707
      %v1782 = vadd.f32 %v1615, %v1709
      %v1783 = vadd.f32 %v1616, %v1778
      %1784 = vst [vmem:[%s280] sm:$0xff] %v1781
      %1785 = vst [vmem:[%s280 + $0x8] sm:$0xff] %v1782
      %1786 = vst [vmem:[%s280 + $0x10] sm:$0xff] %v1783
      %s1787 = smul.u32 3, %s20
      %p1788 = scmp.lt.s32.totalorder %s19, 1
      %s1789 = scalar_select %p1788, %s19, 1
      %p1790 = scmp.lt.s32.totalorder %s1787, 2
      %s1791 = scalar_select %p1790, %s1787, 2
      %s1792 = smul.addr %s1789, 3
      %s1793 = sadd.s32 %s1791, %s1792
      %s1794 = smul.addr %s1793, 8
      %s1795 = scalar_lea.vmem %s4, %s1794
      // Predicated region
      $region37: #{norm_conv2d.1} parent=35 // pred_check
        %p1796 = pneg %p149
      $region38: #{norm_conv2d.1} parent=35 // pred_check_branch
        %1798 = sbr.rel (%p1796) target = $region40
      $region39: #{norm_conv2d.1} parent=35 // pred_region
        %s1799 = smul.u32 3, %s20
      $region40: #{norm_conv2d.1} parent=35 // pred_fallthru
        _
    $region36: #{norm_conv2d.1} parent=5 // pred_fallthru
      _
    %p1800 = scmp.le.s32.totalorder 2, %s10
    // Predicated region
    $region41: #{norm_conv2d.1} parent=5 // pred_check
      %p1801 = pneg %p1800
    $region42: #{norm_conv2d.1} parent=5 // pred_check_branch
      %1803 = sbr.rel (%p1801) target = $region44
    $region43: #{norm_conv2d.1} parent=5 // pred_region
      %s1804 = ssub.s32 %s10, 2
      // Predicated region
      $region45: #{norm_conv2d.1} parent=43 // pred_check
        %p1805 = pneg %p155
      $region46: #{norm_conv2d.1} parent=43 // pred_check_branch
        %1807 = sbr.rel (%p1805) target = $region48
      $region47: #{norm_conv2d.1} parent=43 // pred_region
        %s1808 = smul.u32 3, %s22
        %p1809 = scmp.lt.s32.totalorder %s21, 1
        %s1810 = scalar_select %p1809, %s21, 1
        %p1811 = scmp.lt.s32.totalorder %s1808, 2
        %s1812 = scalar_select %p1811, %s1808, 2
        %s1813 = smul.addr %s1810, 3
        %s1814 = sadd.s32 %s1812, %s1813
        %s1815 = smul.addr %s1814, 8
        %s1816 = scalar_lea.vmem %s4, %s1815
      $region48: #{norm_conv2d.1} parent=43 // pred_fallthru
        _
    $region44: #{norm_conv2d.1} parent=5 // pred_fallthru
      _
  $region6: #{norm_conv2d.1} parent=0 // loop_footer
    %s14 = sadd.s32 1, %s10
  $region7: #{norm_conv2d.1} parent=0 // loop_footer_branch
    %9 = sbr.rel target = $region3
  $region8: #{norm_conv2d.1} parent=0 // loop_exit
    _

</llo_original>
